<compile_context>
chip_gen: v7x
topology: tpu7x:2x2x1
jax: 0.10.0
libtpu: 0.0.40
codegen_flags: <defaults>
</compile_context>

<pallas_src>
import functools

import jax
import jax.numpy as jnp
import numpy as np
from jax.experimental import pallas as pl
from jax.experimental.pallas import tpu as pltpu


# ----------------------------------------------------------------------------
# Fused Seq2Seq kernel.
# ----------------------------------------------------------------------------
def _seq2seq_kernel(S, T,
                    enc_x_ref,                   # (S, H)   pre-projected src rows (+bias)
                    dec_x_ref,                   # (T-1, H) pre-projected trg rows (+bias)
                    enc_whh_ref,                 # (H, H)
                    dec_ww_ref, dec_whh_ref,     # (H, H), (H, H)
                    wlin_ref, blin_ref,          # (H, Opad), (1, Opad)
                    out_ref):                    # (T, Opad)
    H = enc_whh_ref.shape[0]
    Opad = wlin_ref.shape[1]

    enc_whh = enc_whh_ref[...]

    # ---- encoder: unrolled recurrence over S timesteps ----------------------
    # h_t = tanh( (emb @ Wih + b)[src_t] + h_{t-1} @ Whh )
    h = jnp.zeros((1, H), jnp.float32)
    enc_states = []
    for t in range(S):
        xp = enc_x_ref[t:t + 1, :]                               # static slice
        h = jnp.tanh(xp + jnp.dot(h, enc_whh,
                                  preferred_element_type=jnp.float32))
        enc_states.append(h)
    enc_s = jnp.concatenate(enc_states, axis=0)                  # (S, H)
    enc_T = enc_s.T                                              # (H, S), once

    # ---- decoder: unrolled attention + RNN cell over T-1 steps --------------
    # TODO(synk): `self.attention` is an undefined constructor arg in the
    # reference source; implementing dot-product attention (scores = enc . hid,
    # softmax over src_len), same as the pure-JAX reference.
    dec_ww = dec_ww_ref[...]
    dec_whh = dec_whh_ref[...]
    h_dec = []
    for g in range(T - 1):
        # h @ Whh only depends on h: issue it first so the MXU overlaps the
        # softmax exp/divide chain below.
        hh = jnp.dot(h, dec_whh, preferred_element_type=jnp.float32)      # (1, H)
        scores = jnp.dot(h, enc_T, preferred_element_type=jnp.float32)    # (1, S)
        # |scores| <= H (tanh * tanh dot); safe to skip the max-subtraction.
        p = jnp.exp(scores)
        values = p / jnp.sum(p, axis=-1, keepdims=True)                   # (1, S)
        ctx = jnp.dot(values, enc_s, preferred_element_type=jnp.float32)  # (1, H)
        xp = dec_x_ref[g:g + 1, :]
        h = jnp.tanh(xp + hh
                     + jnp.dot(ctx, dec_ww, preferred_element_type=jnp.float32))
        h_dec.append(h)

    # ---- batched, lane-dense output projection, single full-tile store ------
    hs = jnp.concatenate(h_dec, axis=0)                          # (T-1, H)
    logits = jnp.dot(hs, wlin_ref[...],
                     preferred_element_type=jnp.float32) + blin_ref[...]
    out_ref[...] = jnp.concatenate(
        [jnp.zeros((1, Opad), jnp.float32), logits], axis=0)     # outputs[0] = 0


def _whole(shape):
    n = len(shape)
    return pl.BlockSpec(shape, lambda *args, n=n: (0,) * n)


def seq2seq_forward(params, src, trg):
    B, S = src.shape
    _, T = trg.shape
    assert B == 1, "reference Seq2Seq only supports batch == 1 (see NOTE)"
    H = params['enc_whh_t'].shape[0]
    O = params['dec_lin_w_t'].shape[1]
    Opad = ((O + 127) // 128) * 128
    # Skipping the softmax max-subtraction is only valid while exp(|score|)
    # cannot overflow f32; |score| <= H because both operands are tanh outputs.
    assert H <= 80, "softmax max-subtraction removal requires H <= ~80"

    # Hoisted input projections + folded biases: row-gather commutes exactly
    # with the matmul, so (emb @ Wih + b)[tok] == emb[tok] @ Wih + b.
    enc_tab = jnp.dot(params['enc_emb'], params['enc_wih_t']) + params['enc_b']
    dec_tab = jnp.dot(params['dec_emb'], params['dec_w_e']) + params['dec_b']
    # Token gathers in the wrapper (row-major (B,S)/(B,T) flattening, B == 1).
    enc_x = jnp.take(enc_tab, src.reshape(-1), axis=0)                  # (S, H)
    dec_x = jnp.take(dec_tab, trg[:, :T - 1].reshape(-1), axis=0)       # (T-1, H)
    # Lane-pad the output projection to 128 lanes (sliced back below).
    wlin_pad = jnp.zeros((H, Opad), jnp.float32).at[:, :O].set(params['dec_lin_w_t'])
    blin_pad = jnp.zeros((1, Opad), jnp.float32).at[:, :O].set(params['dec_lin_b'])

    kernel = functools.partial(_seq2seq_kernel, S, T)
    out2d = pl.pallas_call(
        kernel,
        out_shape=jax.ShapeDtypeStruct((T, Opad), jnp.float32),
        grid=(1,),
        in_specs=[
            _whole((S, H)),                    # enc_x
            _whole((T - 1, H)),                # dec_x
            _whole((H, H)),                    # enc Whh^T
            _whole((H, H)),                    # dec W_w (ctx proj)
            _whole((H, H)),                    # dec Whh^T
            _whole((H, Opad)),                 # linear weight (padded)
            _whole((1, Opad)),                 # linear bias (padded)
        ],
        out_specs=pl.BlockSpec((T, Opad), lambda *args: (0, 0)),
        compiler_params=pltpu.CompilerParams(dimension_semantics=("arbitrary",)),
    )(enc_x, dec_x, params['enc_whh_t'], params['dec_w_w'],
      params['dec_whh_t'], wlin_pad, blin_pad)

    return out2d[:, :O].reshape(T, B, O)


# ----------------------------------------------------------------------------
# Pure-JAX reference (same math) used as a correctness check.
# ----------------------------------------------------------------------------
def seq2seq_reference(params, src, trg):
    B, S = src.shape
    _, T = trg.shape
    O = params['dec_lin_b'].shape[1]
    H = params['enc_whh_t'].shape[0]

    src_emb = jnp.take(params['enc_emb'], src, axis=0).transpose(1, 0, 2)
    h = jnp.zeros((B, H), jnp.float32)
    enc_outs = []
    for t in range(S):
        h = jnp.tanh(src_emb[t] @ params['enc_wih_t'] + h @ params['enc_whh_t']
                     + params['enc_b'])
        enc_outs.append(h)
    enc_bt = jnp.stack(enc_outs, axis=1)                      # (B, S, H)

    trg_emb = jnp.take(params['dec_emb'], trg, axis=0).transpose(1, 0, 2)
    outs = [jnp.zeros((B, O), jnp.float32)]
    for i in range(1, T):
        scores = jnp.einsum('bsh,bh->bs', enc_bt, h)
        values = jax.nn.softmax(scores, axis=-1)
        weights = jnp.einsum('bs,bsh->bh', values, enc_bt)
        h = jnp.tanh(trg_emb[i - 1] @ params['dec_w_e'] + weights @ params['dec_w_w']
                     + h @ params['dec_whh_t'] + params['dec_b'])
        outs.append(h @ params['dec_lin_w_t'] + params['dec_lin_b'])
    return jnp.stack(outs, axis=0)


def init_params(key, input_dim, output_dim, emb_dim, hid_dim):
    ks = jax.random.split(key, 12)
    u = lambda k, shape, s=0.1: jax.random.uniform(k, shape, jnp.float32, -s, s)
    # Encoder: embedding (input_dim,E); rnn Wih (H,E), Whh (H,H), b_ih+b_hh (H,)
    enc_wih = u(ks[1], (hid_dim, emb_dim))
    enc_whh = u(ks[2], (hid_dim, hid_dim))
    enc_b = u(ks[3], (hid_dim,)) + u(ks[4], (hid_dim,))
    # Decoder: embedding (output_dim,E); rnn Wih (H,E+H), Whh (H,H); linear (O,H)
    dec_wih = u(ks[6], (hid_dim, emb_dim + hid_dim))
    dec_whh = u(ks[7], (hid_dim, hid_dim))
    dec_b = u(ks[8], (hid_dim,)) + u(ks[9], (hid_dim,))
    dec_lin_w = u(ks[10], (output_dim, hid_dim))
    dec_lin_b = u(ks[11], (output_dim,))
    return {
        'enc_emb': jax.random.normal(ks[0], (input_dim, emb_dim), jnp.float32),
        'enc_wih_t': enc_wih.T,                               # (E, H)
        'enc_whh_t': enc_whh.T,                               # (H, H)
        'enc_b': enc_b.reshape(1, hid_dim),
        'dec_emb': jax.random.normal(ks[5], (output_dim, emb_dim), jnp.float32),
        'dec_w_e': dec_wih.T[:emb_dim, :],                    # (E, H)
        'dec_w_w': dec_wih.T[emb_dim:, :],                    # (H, H)
        'dec_whh_t': dec_whh.T,                               # (H, H)
        'dec_b': dec_b.reshape(1, hid_dim),
        'dec_lin_w_t': dec_lin_w.T,                           # (H, O)
        'dec_lin_b': dec_lin_b.reshape(1, output_dim),
    }


if __name__ == "__main__":
    INPUT_DIM, OUTPUT_DIM = 11, 13          # src vocab, trg vocab (= decoder output_dim)
    EMB, HID = 16, 32
    B, S, T = 1, 8, 6                       # batch=1: see NOTE at top of file

    key = jax.random.PRNGKey(0)
    kp, ks, kt = jax.random.split(key, 3)
    params = init_params(kp, INPUT_DIM, OUTPUT_DIM, EMB, HID)
    src = jax.random.randint(ks, (B, S), 0, INPUT_DIM, dtype=jnp.int32)
    trg = jax.random.randint(kt, (B, T), 0, OUTPUT_DIM, dtype=jnp.int32)

    out = jax.jit(seq2seq_forward)(params, src, trg)
    out = jax.block_until_ready(out)
    assert out.shape == (T, B, OUTPUT_DIM)

    ref = seq2seq_reference(params, src, trg)
    np.testing.assert_allclose(np.asarray(out), np.asarray(ref), atol=1e-4, rtol=1e-4)

    print("KERNEL_OK")
</pallas_src>

<mosaic_0001>
module attributes {stable_mosaic.version = 11 : i64} {
  func.func @_seq2seq_kernel(%arg0: i32, %arg1: memref<8x32xf32, #tpu.memory_space<vmem>>, %arg2: memref<5x32xf32, #tpu.memory_space<vmem>>, %arg3: memref<32x32xf32, #tpu.memory_space<vmem>>, %arg4: memref<32x32xf32, #tpu.memory_space<vmem>>, %arg5: memref<32x32xf32, #tpu.memory_space<vmem>>, %arg6: memref<32x128xf32, #tpu.memory_space<vmem>>, %arg7: memref<1x128xf32, #tpu.memory_space<vmem>>, %arg8: memref<6x128xf32, #tpu.memory_space<vmem>>) attributes {dimension_semantics = [#tpu.dimension_semantics<arbitrary>], iteration_bounds = array<i64: 1>, scalar_prefetch = 0 : i64, scratch_operands = 0 : i64, tpu.core_type = #tpu.core_type<tc>, window_params = [{pipeline_mode = #tpu.pipeline_mode<synchronous>, transform_indices = @transform_0, window_bounds = array<i64: 8, 32>}, {pipeline_mode = #tpu.pipeline_mode<synchronous>, transform_indices = @transform_1, window_bounds = array<i64: 5, 32>}, {pipeline_mode = #tpu.pipeline_mode<synchronous>, transform_indices = @transform_2, window_bounds = array<i64: 32, 32>}, {pipeline_mode = #tpu.pipeline_mode<synchronous>, transform_indices = @transform_3, window_bounds = array<i64: 32, 32>}, {pipeline_mode = #tpu.pipeline_mode<synchronous>, transform_indices = @transform_4, window_bounds = array<i64: 32, 32>}, {pipeline_mode = #tpu.pipeline_mode<synchronous>, transform_indices = @transform_5, window_bounds = array<i64: 32, 128>}, {pipeline_mode = #tpu.pipeline_mode<synchronous>, transform_indices = @transform_6, window_bounds = array<i64: 1, 128>}, {pipeline_mode = #tpu.pipeline_mode<synchronous>, transform_indices = @transform_7, window_bounds = array<i64: 6, 128>}]} {
    %c0 = arith.constant 0 : index
    %c0_0 = arith.constant 0 : index
    %0 = vector.load %arg3[%c0, %c0_0] : memref<32x32xf32, #tpu.memory_space<vmem>>, vector<32x32xf32>
    %cst = arith.constant 0.000000e+00 : f32
    %1 = vector.broadcast %cst : f32 to vector<1x32xf32>
    %c0_1 = arith.constant 0 : index
    %c0_2 = arith.constant 0 : index
    %2 = vector.load %arg1[%c0_1, %c0_2] : memref<8x32xf32, #tpu.memory_space<vmem>>, vector<1x32xf32>
    %cst_3 = arith.constant dense<0.000000e+00> : vector<1x32xf32>
    %3 = tpu.matmul %1, %0, %cst_3 {dimension_numbers = #tpu.dot_dimension_numbers<[1], [0], [0], [1], [0, 0, 1, 1], [], []>} : vector<1x32xf32>, vector<32x32xf32>, vector<1x32xf32> -> vector<1x32xf32>
    %4 = arith.addf %2, %3 : vector<1x32xf32>
    %5 = math.tanh %4 : vector<1x32xf32>
    %c1 = arith.constant 1 : index
    %c0_4 = arith.constant 0 : index
    %6 = vector.load %arg1[%c1, %c0_4] : memref<8x32xf32, #tpu.memory_space<vmem>>, vector<1x32xf32>
    %cst_5 = arith.constant dense<0.000000e+00> : vector<1x32xf32>
    %7 = tpu.matmul %5, %0, %cst_5 {dimension_numbers = #tpu.dot_dimension_numbers<[1], [0], [0], [1], [0, 0, 1, 1], [], []>} : vector<1x32xf32>, vector<32x32xf32>, vector<1x32xf32> -> vector<1x32xf32>
    %8 = arith.addf %6, %7 : vector<1x32xf32>
    %9 = math.tanh %8 : vector<1x32xf32>
    %c2 = arith.constant 2 : index
    %c0_6 = arith.constant 0 : index
    %10 = vector.load %arg1[%c2, %c0_6] : memref<8x32xf32, #tpu.memory_space<vmem>>, vector<1x32xf32>
    %cst_7 = arith.constant dense<0.000000e+00> : vector<1x32xf32>
    %11 = tpu.matmul %9, %0, %cst_7 {dimension_numbers = #tpu.dot_dimension_numbers<[1], [0], [0], [1], [0, 0, 1, 1], [], []>} : vector<1x32xf32>, vector<32x32xf32>, vector<1x32xf32> -> vector<1x32xf32>
    %12 = arith.addf %10, %11 : vector<1x32xf32>
    %13 = math.tanh %12 : vector<1x32xf32>
    %c3 = arith.constant 3 : index
    %c0_8 = arith.constant 0 : index
    %14 = vector.load %arg1[%c3, %c0_8] : memref<8x32xf32, #tpu.memory_space<vmem>>, vector<1x32xf32>
    %cst_9 = arith.constant dense<0.000000e+00> : vector<1x32xf32>
    %15 = tpu.matmul %13, %0, %cst_9 {dimension_numbers = #tpu.dot_dimension_numbers<[1], [0], [0], [1], [0, 0, 1, 1], [], []>} : vector<1x32xf32>, vector<32x32xf32>, vector<1x32xf32> -> vector<1x32xf32>
    %16 = arith.addf %14, %15 : vector<1x32xf32>
    %17 = math.tanh %16 : vector<1x32xf32>
    %c4 = arith.constant 4 : index
    %c0_10 = arith.constant 0 : index
    %18 = vector.load %arg1[%c4, %c0_10] : memref<8x32xf32, #tpu.memory_space<vmem>>, vector<1x32xf32>
    %cst_11 = arith.constant dense<0.000000e+00> : vector<1x32xf32>
    %19 = tpu.matmul %17, %0, %cst_11 {dimension_numbers = #tpu.dot_dimension_numbers<[1], [0], [0], [1], [0, 0, 1, 1], [], []>} : vector<1x32xf32>, vector<32x32xf32>, vector<1x32xf32> -> vector<1x32xf32>
    %20 = arith.addf %18, %19 : vector<1x32xf32>
    %21 = math.tanh %20 : vector<1x32xf32>
    %c5 = arith.constant 5 : index
    %c0_12 = arith.constant 0 : index
    %22 = vector.load %arg1[%c5, %c0_12] : memref<8x32xf32, #tpu.memory_space<vmem>>, vector<1x32xf32>
    %cst_13 = arith.constant dense<0.000000e+00> : vector<1x32xf32>
    %23 = tpu.matmul %21, %0, %cst_13 {dimension_numbers = #tpu.dot_dimension_numbers<[1], [0], [0], [1], [0, 0, 1, 1], [], []>} : vector<1x32xf32>, vector<32x32xf32>, vector<1x32xf32> -> vector<1x32xf32>
    %24 = arith.addf %22, %23 : vector<1x32xf32>
    %25 = math.tanh %24 : vector<1x32xf32>
    %c6 = arith.constant 6 : index
    %c0_14 = arith.constant 0 : index
    %26 = vector.load %arg1[%c6, %c0_14] : memref<8x32xf32, #tpu.memory_space<vmem>>, vector<1x32xf32>
    %cst_15 = arith.constant dense<0.000000e+00> : vector<1x32xf32>
    %27 = tpu.matmul %25, %0, %cst_15 {dimension_numbers = #tpu.dot_dimension_numbers<[1], [0], [0], [1], [0, 0, 1, 1], [], []>} : vector<1x32xf32>, vector<32x32xf32>, vector<1x32xf32> -> vector<1x32xf32>
    %28 = arith.addf %26, %27 : vector<1x32xf32>
    %29 = math.tanh %28 : vector<1x32xf32>
    %c7 = arith.constant 7 : index
    %c0_16 = arith.constant 0 : index
    %30 = vector.load %arg1[%c7, %c0_16] : memref<8x32xf32, #tpu.memory_space<vmem>>, vector<1x32xf32>
    %cst_17 = arith.constant dense<0.000000e+00> : vector<1x32xf32>
    %31 = tpu.matmul %29, %0, %cst_17 {dimension_numbers = #tpu.dot_dimension_numbers<[1], [0], [0], [1], [0, 0, 1, 1], [], []>} : vector<1x32xf32>, vector<32x32xf32>, vector<1x32xf32> -> vector<1x32xf32>
    %32 = arith.addf %30, %31 : vector<1x32xf32>
    %33 = math.tanh %32 : vector<1x32xf32>
    %34 = tpu.concatenate %5, %9, %13, %17, %21, %25, %29, %33 in 0 : vector<1x32xf32>, vector<1x32xf32>, vector<1x32xf32>, vector<1x32xf32>, vector<1x32xf32>, vector<1x32xf32>, vector<1x32xf32>, vector<1x32xf32> -> vector<8x32xf32>
    %35 = tpu.transpose %34, [1, 0] : vector<8x32xf32> -> vector<32x8xf32>
    %c0_18 = arith.constant 0 : index
    %c0_19 = arith.constant 0 : index
    %36 = vector.load %arg4[%c0_18, %c0_19] : memref<32x32xf32, #tpu.memory_space<vmem>>, vector<32x32xf32>
    %c0_20 = arith.constant 0 : index
    %c0_21 = arith.constant 0 : index
    %37 = vector.load %arg5[%c0_20, %c0_21] : memref<32x32xf32, #tpu.memory_space<vmem>>, vector<32x32xf32>
    %cst_22 = arith.constant dense<0.000000e+00> : vector<1x32xf32>
    %38 = tpu.matmul %33, %37, %cst_22 {dimension_numbers = #tpu.dot_dimension_numbers<[1], [0], [0], [1], [0, 0, 1, 1], [], []>} : vector<1x32xf32>, vector<32x32xf32>, vector<1x32xf32> -> vector<1x32xf32>
    %cst_23 = arith.constant dense<0.000000e+00> : vector<1x8xf32>
    %39 = tpu.matmul %33, %35, %cst_23 {dimension_numbers = #tpu.dot_dimension_numbers<[1], [0], [0], [1], [0, 0, 1, 1], [], []>} : vector<1x32xf32>, vector<32x8xf32>, vector<1x8xf32> -> vector<1x8xf32>
    %40 = math.exp %39 : vector<1x8xf32>
    %cst_24 = arith.constant dense<0.000000e+00> : vector<1xf32>
    %41 = vector.multi_reduction <add>, %40, %cst_24 [1] : vector<1x8xf32> to vector<1xf32>
    %42 = vector.shape_cast %41 : vector<1xf32> to vector<1x1xf32>
    %43 = vector.broadcast %42 : vector<1x1xf32> to vector<1x8xf32>
    %44 = arith.divf %40, %43 : vector<1x8xf32>
    %cst_25 = arith.constant dense<0.000000e+00> : vector<1x32xf32>
    %45 = tpu.matmul %44, %34, %cst_25 {dimension_numbers = #tpu.dot_dimension_numbers<[1], [0], [0], [1], [0, 0, 1, 1], [], []>} : vector<1x8xf32>, vector<8x32xf32>, vector<1x32xf32> -> vector<1x32xf32>
    %c0_26 = arith.constant 0 : index
    %c0_27 = arith.constant 0 : index
    %46 = vector.load %arg2[%c0_26, %c0_27] : memref<5x32xf32, #tpu.memory_space<vmem>>, vector<1x32xf32>
    %47 = arith.addf %46, %38 : vector<1x32xf32>
    %cst_28 = arith.constant dense<0.000000e+00> : vector<1x32xf32>
    %48 = tpu.matmul %45, %36, %cst_28 {dimension_numbers = #tpu.dot_dimension_numbers<[1], [0], [0], [1], [0, 0, 1, 1], [], []>} : vector<1x32xf32>, vector<32x32xf32>, vector<1x32xf32> -> vector<1x32xf32>
    %49 = arith.addf %47, %48 : vector<1x32xf32>
    %50 = math.tanh %49 : vector<1x32xf32>
    %cst_29 = arith.constant dense<0.000000e+00> : vector<1x32xf32>
    %51 = tpu.matmul %50, %37, %cst_29 {dimension_numbers = #tpu.dot_dimension_numbers<[1], [0], [0], [1], [0, 0, 1, 1], [], []>} : vector<1x32xf32>, vector<32x32xf32>, vector<1x32xf32> -> vector<1x32xf32>
    %cst_30 = arith.constant dense<0.000000e+00> : vector<1x8xf32>
    %52 = tpu.matmul %50, %35, %cst_30 {dimension_numbers = #tpu.dot_dimension_numbers<[1], [0], [0], [1], [0, 0, 1, 1], [], []>} : vector<1x32xf32>, vector<32x8xf32>, vector<1x8xf32> -> vector<1x8xf32>
    %53 = math.exp %52 : vector<1x8xf32>
    %cst_31 = arith.constant dense<0.000000e+00> : vector<1xf32>
    %54 = vector.multi_reduction <add>, %53, %cst_31 [1] : vector<1x8xf32> to vector<1xf32>
    %55 = vector.shape_cast %54 : vector<1xf32> to vector<1x1xf32>
    %56 = vector.broadcast %55 : vector<1x1xf32> to vector<1x8xf32>
    %57 = arith.divf %53, %56 : vector<1x8xf32>
    %cst_32 = arith.constant dense<0.000000e+00> : vector<1x32xf32>
    %58 = tpu.matmul %57, %34, %cst_32 {dimension_numbers = #tpu.dot_dimension_numbers<[1], [0], [0], [1], [0, 0, 1, 1], [], []>} : vector<1x8xf32>, vector<8x32xf32>, vector<1x32xf32> -> vector<1x32xf32>
    %c1_33 = arith.constant 1 : index
    %c0_34 = arith.constant 0 : index
    %59 = vector.load %arg2[%c1_33, %c0_34] : memref<5x32xf32, #tpu.memory_space<vmem>>, vector<1x32xf32>
    %60 = arith.addf %59, %51 : vector<1x32xf32>
    %cst_35 = arith.constant dense<0.000000e+00> : vector<1x32xf32>
    %61 = tpu.matmul %58, %36, %cst_35 {dimension_numbers = #tpu.dot_dimension_numbers<[1], [0], [0], [1], [0, 0, 1, 1], [], []>} : vector<1x32xf32>, vector<32x32xf32>, vector<1x32xf32> -> vector<1x32xf32>
    %62 = arith.addf %60, %61 : vector<1x32xf32>
    %63 = math.tanh %62 : vector<1x32xf32>
    %cst_36 = arith.constant dense<0.000000e+00> : vector<1x32xf32>
    %64 = tpu.matmul %63, %37, %cst_36 {dimension_numbers = #tpu.dot_dimension_numbers<[1], [0], [0], [1], [0, 0, 1, 1], [], []>} : vector<1x32xf32>, vector<32x32xf32>, vector<1x32xf32> -> vector<1x32xf32>
    %cst_37 = arith.constant dense<0.000000e+00> : vector<1x8xf32>
    %65 = tpu.matmul %63, %35, %cst_37 {dimension_numbers = #tpu.dot_dimension_numbers<[1], [0], [0], [1], [0, 0, 1, 1], [], []>} : vector<1x32xf32>, vector<32x8xf32>, vector<1x8xf32> -> vector<1x8xf32>
    %66 = math.exp %65 : vector<1x8xf32>
    %cst_38 = arith.constant dense<0.000000e+00> : vector<1xf32>
    %67 = vector.multi_reduction <add>, %66, %cst_38 [1] : vector<1x8xf32> to vector<1xf32>
    %68 = vector.shape_cast %67 : vector<1xf32> to vector<1x1xf32>
    %69 = vector.broadcast %68 : vector<1x1xf32> to vector<1x8xf32>
    %70 = arith.divf %66, %69 : vector<1x8xf32>
    %cst_39 = arith.constant dense<0.000000e+00> : vector<1x32xf32>
    %71 = tpu.matmul %70, %34, %cst_39 {dimension_numbers = #tpu.dot_dimension_numbers<[1], [0], [0], [1], [0, 0, 1, 1], [], []>} : vector<1x8xf32>, vector<8x32xf32>, vector<1x32xf32> -> vector<1x32xf32>
    %c2_40 = arith.constant 2 : index
    %c0_41 = arith.constant 0 : index
    %72 = vector.load %arg2[%c2_40, %c0_41] : memref<5x32xf32, #tpu.memory_space<vmem>>, vector<1x32xf32>
    %73 = arith.addf %72, %64 : vector<1x32xf32>
    %cst_42 = arith.constant dense<0.000000e+00> : vector<1x32xf32>
    %74 = tpu.matmul %71, %36, %cst_42 {dimension_numbers = #tpu.dot_dimension_numbers<[1], [0], [0], [1], [0, 0, 1, 1], [], []>} : vector<1x32xf32>, vector<32x32xf32>, vector<1x32xf32> -> vector<1x32xf32>
    %75 = arith.addf %73, %74 : vector<1x32xf32>
    %76 = math.tanh %75 : vector<1x32xf32>
    %cst_43 = arith.constant dense<0.000000e+00> : vector<1x32xf32>
    %77 = tpu.matmul %76, %37, %cst_43 {dimension_numbers = #tpu.dot_dimension_numbers<[1], [0], [0], [1], [0, 0, 1, 1], [], []>} : vector<1x32xf32>, vector<32x32xf32>, vector<1x32xf32> -> vector<1x32xf32>
    %cst_44 = arith.constant dense<0.000000e+00> : vector<1x8xf32>
    %78 = tpu.matmul %76, %35, %cst_44 {dimension_numbers = #tpu.dot_dimension_numbers<[1], [0], [0], [1], [0, 0, 1, 1], [], []>} : vector<1x32xf32>, vector<32x8xf32>, vector<1x8xf32> -> vector<1x8xf32>
    %79 = math.exp %78 : vector<1x8xf32>
    %cst_45 = arith.constant dense<0.000000e+00> : vector<1xf32>
    %80 = vector.multi_reduction <add>, %79, %cst_45 [1] : vector<1x8xf32> to vector<1xf32>
    %81 = vector.shape_cast %80 : vector<1xf32> to vector<1x1xf32>
    %82 = vector.broadcast %81 : vector<1x1xf32> to vector<1x8xf32>
    %83 = arith.divf %79, %82 : vector<1x8xf32>
    %cst_46 = arith.constant dense<0.000000e+00> : vector<1x32xf32>
    %84 = tpu.matmul %83, %34, %cst_46 {dimension_numbers = #tpu.dot_dimension_numbers<[1], [0], [0], [1], [0, 0, 1, 1], [], []>} : vector<1x8xf32>, vector<8x32xf32>, vector<1x32xf32> -> vector<1x32xf32>
    %c3_47 = arith.constant 3 : index
    %c0_48 = arith.constant 0 : index
    %85 = vector.load %arg2[%c3_47, %c0_48] : memref<5x32xf32, #tpu.memory_space<vmem>>, vector<1x32xf32>
    %86 = arith.addf %85, %77 : vector<1x32xf32>
    %cst_49 = arith.constant dense<0.000000e+00> : vector<1x32xf32>
    %87 = tpu.matmul %84, %36, %cst_49 {dimension_numbers = #tpu.dot_dimension_numbers<[1], [0], [0], [1], [0, 0, 1, 1], [], []>} : vector<1x32xf32>, vector<32x32xf32>, vector<1x32xf32> -> vector<1x32xf32>
    %88 = arith.addf %86, %87 : vector<1x32xf32>
    %89 = math.tanh %88 : vector<1x32xf32>
    %cst_50 = arith.constant dense<0.000000e+00> : vector<1x32xf32>
    %90 = tpu.matmul %89, %37, %cst_50 {dimension_numbers = #tpu.dot_dimension_numbers<[1], [0], [0], [1], [0, 0, 1, 1], [], []>} : vector<1x32xf32>, vector<32x32xf32>, vector<1x32xf32> -> vector<1x32xf32>
    %cst_51 = arith.constant dense<0.000000e+00> : vector<1x8xf32>
    %91 = tpu.matmul %89, %35, %cst_51 {dimension_numbers = #tpu.dot_dimension_numbers<[1], [0], [0], [1], [0, 0, 1, 1], [], []>} : vector<1x32xf32>, vector<32x8xf32>, vector<1x8xf32> -> vector<1x8xf32>
    %92 = math.exp %91 : vector<1x8xf32>
    %cst_52 = arith.constant dense<0.000000e+00> : vector<1xf32>
    %93 = vector.multi_reduction <add>, %92, %cst_52 [1] : vector<1x8xf32> to vector<1xf32>
    %94 = vector.shape_cast %93 : vector<1xf32> to vector<1x1xf32>
    %95 = vector.broadcast %94 : vector<1x1xf32> to vector<1x8xf32>
    %96 = arith.divf %92, %95 : vector<1x8xf32>
    %cst_53 = arith.constant dense<0.000000e+00> : vector<1x32xf32>
    %97 = tpu.matmul %96, %34, %cst_53 {dimension_numbers = #tpu.dot_dimension_numbers<[1], [0], [0], [1], [0, 0, 1, 1], [], []>} : vector<1x8xf32>, vector<8x32xf32>, vector<1x32xf32> -> vector<1x32xf32>
    %c4_54 = arith.constant 4 : index
    %c0_55 = arith.constant 0 : index
    %98 = vector.load %arg2[%c4_54, %c0_55] : memref<5x32xf32, #tpu.memory_space<vmem>>, vector<1x32xf32>
    %99 = arith.addf %98, %90 : vector<1x32xf32>
    %cst_56 = arith.constant dense<0.000000e+00> : vector<1x32xf32>
    %100 = tpu.matmul %97, %36, %cst_56 {dimension_numbers = #tpu.dot_dimension_numbers<[1], [0], [0], [1], [0, 0, 1, 1], [], []>} : vector<1x32xf32>, vector<32x32xf32>, vector<1x32xf32> -> vector<1x32xf32>
    %101 = arith.addf %99, %100 : vector<1x32xf32>
    %102 = math.tanh %101 : vector<1x32xf32>
    %103 = tpu.concatenate %50, %63, %76, %89, %102 in 0 : vector<1x32xf32>, vector<1x32xf32>, vector<1x32xf32>, vector<1x32xf32>, vector<1x32xf32> -> vector<5x32xf32>
    %c0_57 = arith.constant 0 : index
    %c0_58 = arith.constant 0 : index
    %104 = vector.load %arg6[%c0_57, %c0_58] : memref<32x128xf32, #tpu.memory_space<vmem>>, vector<32x128xf32>
    %cst_59 = arith.constant dense<0.000000e+00> : vector<5x128xf32>
    %105 = tpu.matmul %103, %104, %cst_59 {dimension_numbers = #tpu.dot_dimension_numbers<[1], [0], [0], [1], [0, 0, 1, 1], [], []>} : vector<5x32xf32>, vector<32x128xf32>, vector<5x128xf32> -> vector<5x128xf32>
    %c0_60 = arith.constant 0 : index
    %c0_61 = arith.constant 0 : index
    %106 = vector.load %arg7[%c0_60, %c0_61] : memref<1x128xf32, #tpu.memory_space<vmem>>, vector<1x128xf32>
    %107 = vector.broadcast %106 : vector<1x128xf32> to vector<5x128xf32>
    %108 = arith.addf %105, %107 : vector<5x128xf32>
    %cst_62 = arith.constant 0.000000e+00 : f32
    %109 = vector.broadcast %cst_62 : f32 to vector<1x128xf32>
    %110 = tpu.concatenate %109, %108 in 0 : vector<1x128xf32>, vector<5x128xf32> -> vector<6x128xf32>
    %c0_63 = arith.constant 0 : index
    %c0_64 = arith.constant 0 : index
    %111 = vector.load %arg8[%c0_63, %c0_64] : memref<6x128xf32, #tpu.memory_space<vmem>>, vector<6x128xf32>
    tpu.vector_store %arg8[%c0_63, %c0_64], %110 {strides = array<i32>} : memref<6x128xf32, #tpu.memory_space<vmem>>, vector<6x128xf32>,
    return
  }
  func.func @transform_0(%arg0: i32) -> (i32, i32) {
    %c0_i32 = arith.constant 0 : i32
    %c0_i32_0 = arith.constant 0 : i32
    %c0_i32_1 = arith.constant 0 : i32
    return %c0_i32, %c0_i32_0 : i32, i32
  }
  func.func @transform_1(%arg0: i32) -> (i32, i32) {
    %c0_i32 = arith.constant 0 : i32
    %c0_i32_0 = arith.constant 0 : i32
    %c0_i32_1 = arith.constant 0 : i32
    return %c0_i32, %c0_i32_0 : i32, i32
  }
  func.func @transform_2(%arg0: i32) -> (i32, i32) {
    %c0_i32 = arith.constant 0 : i32
    %c0_i32_0 = arith.constant 0 : i32
    %c0_i32_1 = arith.constant 0 : i32
    return %c0_i32, %c0_i32_0 : i32, i32
  }
  func.func @transform_3(%arg0: i32) -> (i32, i32) {
    %c0_i32 = arith.constant 0 : i32
    %c0_i32_0 = arith.constant 0 : i32
    %c0_i32_1 = arith.constant 0 : i32
    return %c0_i32, %c0_i32_0 : i32, i32
  }
  func.func @transform_4(%arg0: i32) -> (i32, i32) {
    %c0_i32 = arith.constant 0 : i32
    %c0_i32_0 = arith.constant 0 : i32
    %c0_i32_1 = arith.constant 0 : i32
    return %c0_i32, %c0_i32_0 : i32, i32
  }
  func.func @transform_5(%arg0: i32) -> (i32, i32) {
    %c0_i32 = arith.constant 0 : i32
    %c0_i32_0 = arith.constant 0 : i32
    %c0_i32_1 = arith.constant 0 : i32
    return %c0_i32, %c0_i32_0 : i32, i32
  }
  func.func @transform_6(%arg0: i32) -> (i32, i32) {
    %c0_i32 = arith.constant 0 : i32
    %c0_i32_0 = arith.constant 0 : i32
    %c0_i32_1 = arith.constant 0 : i32
    return %c0_i32, %c0_i32_0 : i32, i32
  }
  func.func @transform_7(%arg0: i32) -> (i32, i32) {
    %c0_i32 = arith.constant 0 : i32
    %c0_i32_0 = arith.constant 0 : i32
    %c0_i32_1 = arith.constant 0 : i32
    return %c0_i32, %c0_i32_0 : i32, i32
  }
}

</mosaic_0001>

<llo_original>
// kernel: seq2seq_forward.1
$region0: #{seq2seq_forward.1}
  #allocation0 [shape = 'u32[]', space=smem, size = 0x4, offset = 0x4, fixed_abs, tag = 'smem constant byte address 0x4 - core index']
  #allocation1 [shape = 'u32[144,128]{1,0:T(1,128)}', space=vmem, size = 0x12000, scoped, tag = 'internal scratch']
  %s0 = inlined_call_operand.vmem [shape: f32[8,32], index: 0, kind: input, shape index: {}]
  %s1 = inlined_call_operand.vmem [shape: f32[5,32], index: 1, kind: input, shape index: {}]
  %s2 = inlined_call_operand.vmem [shape: f32[32,32], index: 2, kind: input, shape index: {}]
  %s3 = inlined_call_operand.vmem [shape: f32[32,32], index: 3, kind: input, shape index: {}]
  %s4 = inlined_call_operand.vmem [shape: f32[32,32], index: 4, kind: input, shape index: {}]
  %s5 = inlined_call_operand.vmem [shape: f32[32,128], index: 5, kind: input, shape index: {}]
  %s6 = inlined_call_operand.vmem [shape: f32[1,128], index: 6, kind: input, shape index: {}]
  %s7 = inlined_call_operand.vmem [shape: f32[6,128], index: 7, kind: output, shape index: {}]
  %s8 = sld [smem:[#allocation0]]
  $region38: #{seq2seq_forward.1} parent=0
    _
  %s10 = ssub.s32 1, %s8
  %s11 = scalar_select 0, %s10, %s8
  // Predicated region
  $region2: #{seq2seq_forward.1} parent=0 // pred_check
    _
  $region3: #{seq2seq_forward.1} parent=0 // pred_check_branch
    %13 = sbr.rel (0) target = $region5
  $region4: #{seq2seq_forward.1} parent=0 // pred_region
    _
  $region5: #{seq2seq_forward.1} parent=0 // pred_fallthru
    _
  // Predicated region
  $region6: #{seq2seq_forward.1} parent=0 // pred_check
    _
  $region7: #{seq2seq_forward.1} parent=0 // pred_check_branch
    %15 = sbr.rel (0) target = $region9
  $region8: #{seq2seq_forward.1} parent=0 // pred_region
    _
  $region9: #{seq2seq_forward.1} parent=0 // pred_fallthru
    _
  // Predicated region
  $region10: #{seq2seq_forward.1} parent=0 // pred_check
    _
  $region11: #{seq2seq_forward.1} parent=0 // pred_check_branch
    %17 = sbr.rel (0) target = $region13
  $region12: #{seq2seq_forward.1} parent=0 // pred_region
    _
  $region13: #{seq2seq_forward.1} parent=0 // pred_fallthru
    _
  // Predicated region
  $region14: #{seq2seq_forward.1} parent=0 // pred_check
    _
  $region15: #{seq2seq_forward.1} parent=0 // pred_check_branch
    %19 = sbr.rel (0) target = $region17
  $region16: #{seq2seq_forward.1} parent=0 // pred_region
    _
  $region17: #{seq2seq_forward.1} parent=0 // pred_fallthru
    _
  // Predicated region
  $region18: #{seq2seq_forward.1} parent=0 // pred_check
    _
  $region19: #{seq2seq_forward.1} parent=0 // pred_check_branch
    %21 = sbr.rel (0) target = $region21
  $region20: #{seq2seq_forward.1} parent=0 // pred_region
    _
  $region21: #{seq2seq_forward.1} parent=0 // pred_fallthru
    _
  // Predicated region
  $region22: #{seq2seq_forward.1} parent=0 // pred_check
    _
  $region23: #{seq2seq_forward.1} parent=0 // pred_check_branch
    %23 = sbr.rel (0) target = $region25
  $region24: #{seq2seq_forward.1} parent=0 // pred_region
    _
  $region25: #{seq2seq_forward.1} parent=0 // pred_fallthru
    _
  // Predicated region
  $region26: #{seq2seq_forward.1} parent=0 // pred_check
    _
  $region27: #{seq2seq_forward.1} parent=0 // pred_check_branch
    %25 = sbr.rel (0) target = $region29
  $region28: #{seq2seq_forward.1} parent=0 // pred_region
    _
  $region29: #{seq2seq_forward.1} parent=0 // pred_fallthru
    _
  %v26 = vld [vmem:[%s2] sm:$0xff]
  %v27 = vld [vmem:[%s2 + $0x8] sm:$0xff]
  %v28 = vld [vmem:[%s2 + $0x10] sm:$0xff]
  %v29 = vld [vmem:[%s2 + $0x18] sm:$0xff]
  %v30 = vld [vmem:[%s0] sm:$0x1]
  %vm31 = vcmask 261120
  %v33 = vsel %vm31, 0.0, 0
  %35 = vmatprep.subr.mxu0 0.0
  %36 = vmatpush1.msra.mxu0 %v26
  %37 = vmatprep.subr.mxu0 0.0
  %38 = vmatpush1.msra.mxu0 %v27
  %39 = vmatprep.subr.mxu0 0.0
  %40 = vmatpush1.msra.mxu0 %v28
  %41 = vmatprep.subr.mxu0 0.0
  %42 = vmatpush1.msra.mxu0 %v29
  %43 = vmatprep.subr.mxu0 0.0
  %44 = vmatpush1.msra.mxu0 0.0
  %45 = vmatprep.subr.mxu0 0.0
  %46 = vmatpush1.msra.mxu0 0.0
  %47 = vmatprep.subr.mxu0 0.0
  %48 = vmatpush1.msra.mxu0 0.0
  %49 = vmatprep.subr.mxu0 0.0
  %50 = vmatpush1.msra.mxu0 0.0
  %51 = vmatprep.subr.mxu0 0.0
  %52 = vmatpush1.msra.mxu0 0.0
  %53 = vmatprep.subr.mxu0 0.0
  %54 = vmatpush1.msra.mxu0 0.0
  %55 = vmatprep.subr.mxu0 0.0
  %56 = vmatpush1.msra.mxu0 0.0
  %57 = vmatprep.subr.mxu0 0.0
  %58 = vmatpush1.msra.mxu0 0.0
  %59 = vmatprep.subr.mxu0 0.0
  %60 = vmatpush1.msra.mxu0 0.0
  %61 = vmatprep.subr.mxu0 0.0
  %62 = vmatpush1.msra.mxu0 0.0
  %63 = vmatprep.subr.mxu0 0.0
  %64 = vmatpush1.msra.mxu0 0.0
  %65 = vmatprep.subr.mxu0 0.0
  %66 = vmatpush1.msra.mxu0 0.0
  %67 = vmatprep.subr.mxu0 0.0
  %68 = vmatpush1.msra.mxu0 0.0
  %69 = vmatprep.subr.mxu0 0.0
  %70 = vmatpush1.msra.mxu0 0.0
  %71 = vmatprep.subr.mxu0 0.0
  %72 = vmatpush1.msra.mxu0 0.0
  %73 = vmatprep.subr.mxu0 0.0
  %74 = vmatpush1.msra.mxu0 0.0
  %75 = vmatprep.subr.mxu0 0.0
  %76 = vmatpush1.msra.mxu0 0.0
  %77 = vmatprep.subr.mxu0 0.0
  %78 = vmatpush1.msra.mxu0 0.0
  %79 = vmatprep.subr.mxu0 0.0
  %80 = vmatpush1.msra.mxu0 0.0
  %81 = vmatprep.subr.mxu0 0.0
  %82 = vmatpush1.msra.mxu0 0.0
  %83 = vmatprep.subr.mxu0 0.0
  %84 = vmatpush1.msra.mxu0 0.0
  %85 = vmatprep.subr.mxu0 0.0
  %86 = vmatpush1.msra.mxu0 0.0
  %87 = vmatprep.subr.mxu0 0.0
  %88 = vmatpush1.msra.mxu0 0.0
  %89 = vmatprep.subr.mxu0 0.0
  %90 = vmatpush1.msra.mxu0 0.0
  %91 = vmatprep.subr.mxu0 0.0
  %92 = vmatpush1.msra.mxu0 0.0
  %93 = vmatprep.subr.mxu0 0.0
  %94 = vmatpush1.msra.mxu0 0.0
  %95 = vmatprep.subr.mxu0 0.0
  %96 = vmatpush1.msra.mxu0 0.0
  %97 = vmatprep.subr.mxu0 0.0
  %98 = vmatpush1.msra.mxu0 0.0
  %99 = vmatprep.mubr.f32.mxu0 0.0
  %100 = vmatmul.mubr.f32.gmra.mrb[0].mxu0 %v33
  %v101 = vpop.f32.mrb[0].mxu0
  %v102 = vadd.f32 0.0, %v101
  %v103 = vpop.f32.mrb[0].mxu0
  %104 = vdwg.mxu0
  %v105 = vadd.f32 %v30, %v102
  %v106 = vtanh.pop %v105
  %v107 = vld [vmem:[%s0 + $0x1] sm:$0x1]
  %v109 = vsel %vm31, %v106, 0
  %111 = vmatprep.subr.mxu0 0.0
  %112 = vmatpush1.msra.mxu0 %v26
  %113 = vmatprep.subr.mxu0 0.0
  %114 = vmatpush1.msra.mxu0 %v27
  %115 = vmatprep.subr.mxu0 0.0
  %116 = vmatpush1.msra.mxu0 %v28
  %117 = vmatprep.subr.mxu0 0.0
  %118 = vmatpush1.msra.mxu0 %v29
  %119 = vmatprep.subr.mxu0 0.0
  %120 = vmatpush1.msra.mxu0 0.0
  %121 = vmatprep.subr.mxu0 0.0
  %122 = vmatpush1.msra.mxu0 0.0
  %123 = vmatprep.subr.mxu0 0.0
  %124 = vmatpush1.msra.mxu0 0.0
  %125 = vmatprep.subr.mxu0 0.0
  %126 = vmatpush1.msra.mxu0 0.0
  %127 = vmatprep.subr.mxu0 0.0
  %128 = vmatpush1.msra.mxu0 0.0
  %129 = vmatprep.subr.mxu0 0.0
  %130 = vmatpush1.msra.mxu0 0.0
  %131 = vmatprep.subr.mxu0 0.0
  %132 = vmatpush1.msra.mxu0 0.0
  %133 = vmatprep.subr.mxu0 0.0
  %134 = vmatpush1.msra.mxu0 0.0
  %135 = vmatprep.subr.mxu0 0.0
  %136 = vmatpush1.msra.mxu0 0.0
  %137 = vmatprep.subr.mxu0 0.0
  %138 = vmatpush1.msra.mxu0 0.0
  %139 = vmatprep.subr.mxu0 0.0
  %140 = vmatpush1.msra.mxu0 0.0
  %141 = vmatprep.subr.mxu0 0.0
  %142 = vmatpush1.msra.mxu0 0.0
  %143 = vmatprep.subr.mxu0 0.0
  %144 = vmatpush1.msra.mxu0 0.0
  %145 = vmatprep.subr.mxu0 0.0
  %146 = vmatpush1.msra.mxu0 0.0
  %147 = vmatprep.subr.mxu0 0.0
  %148 = vmatpush1.msra.mxu0 0.0
  %149 = vmatprep.subr.mxu0 0.0
  %150 = vmatpush1.msra.mxu0 0.0
  %151 = vmatprep.subr.mxu0 0.0
  %152 = vmatpush1.msra.mxu0 0.0
  %153 = vmatprep.subr.mxu0 0.0
  %154 = vmatpush1.msra.mxu0 0.0
  %155 = vmatprep.subr.mxu0 0.0
  %156 = vmatpush1.msra.mxu0 0.0
  %157 = vmatprep.subr.mxu0 0.0
  %158 = vmatpush1.msra.mxu0 0.0
  %159 = vmatprep.subr.mxu0 0.0
  %160 = vmatpush1.msra.mxu0 0.0
  %161 = vmatprep.subr.mxu0 0.0
  %162 = vmatpush1.msra.mxu0 0.0
  %163 = vmatprep.subr.mxu0 0.0
  %164 = vmatpush1.msra.mxu0 0.0
  %165 = vmatprep.subr.mxu0 0.0
  %166 = vmatpush1.msra.mxu0 0.0
  %167 = vmatprep.subr.mxu0 0.0
  %168 = vmatpush1.msra.mxu0 0.0
  %169 = vmatprep.subr.mxu0 0.0
  %170 = vmatpush1.msra.mxu0 0.0
  %171 = vmatprep.subr.mxu0 0.0
  %172 = vmatpush1.msra.mxu0 0.0
  %173 = vmatprep.subr.mxu0 0.0
  %174 = vmatpush1.msra.mxu0 0.0
  %175 = vmatprep.mubr.f32.mxu0 0.0
  %176 = vmatmul.mubr.f32.gmra.mrb[0].mxu0 %v109
  %v177 = vpop.f32.mrb[0].mxu0
  %v178 = vadd.f32 0.0, %v177
  %v179 = vpop.f32.mrb[0].mxu0
  %180 = vdwg.mxu0
  %v181 = vadd.f32 %v107, %v178
  %v182 = vtanh.pop %v181
  %v183 = vld [vmem:[%s0 + $0x2] sm:$0x1]
  %v185 = vsel %vm31, %v182, 0
  %187 = vmatprep.subr.mxu0 0.0
  %188 = vmatpush1.msra.mxu0 %v26
  %189 = vmatprep.subr.mxu0 0.0
  %190 = vmatpush1.msra.mxu0 %v27
  %191 = vmatprep.subr.mxu0 0.0
  %192 = vmatpush1.msra.mxu0 %v28
  %193 = vmatprep.subr.mxu0 0.0
  %194 = vmatpush1.msra.mxu0 %v29
  %195 = vmatprep.subr.mxu0 0.0
  %196 = vmatpush1.msra.mxu0 0.0
  %197 = vmatprep.subr.mxu0 0.0
  %198 = vmatpush1.msra.mxu0 0.0
  %199 = vmatprep.subr.mxu0 0.0
  %200 = vmatpush1.msra.mxu0 0.0
  %201 = vmatprep.subr.mxu0 0.0
  %202 = vmatpush1.msra.mxu0 0.0
  %203 = vmatprep.subr.mxu0 0.0
  %204 = vmatpush1.msra.mxu0 0.0
  %205 = vmatprep.subr.mxu0 0.0
  %206 = vmatpush1.msra.mxu0 0.0
  %207 = vmatprep.subr.mxu0 0.0
  %208 = vmatpush1.msra.mxu0 0.0
  %209 = vmatprep.subr.mxu0 0.0
  %210 = vmatpush1.msra.mxu0 0.0
  %211 = vmatprep.subr.mxu0 0.0
  %212 = vmatpush1.msra.mxu0 0.0
  %213 = vmatprep.subr.mxu0 0.0
  %214 = vmatpush1.msra.mxu0 0.0
  %215 = vmatprep.subr.mxu0 0.0
  %216 = vmatpush1.msra.mxu0 0.0
  %217 = vmatprep.subr.mxu0 0.0
  %218 = vmatpush1.msra.mxu0 0.0
  %219 = vmatprep.subr.mxu0 0.0
  %220 = vmatpush1.msra.mxu0 0.0
  %221 = vmatprep.subr.mxu0 0.0
  %222 = vmatpush1.msra.mxu0 0.0
  %223 = vmatprep.subr.mxu0 0.0
  %224 = vmatpush1.msra.mxu0 0.0
  %225 = vmatprep.subr.mxu0 0.0
  %226 = vmatpush1.msra.mxu0 0.0
  %227 = vmatprep.subr.mxu0 0.0
  %228 = vmatpush1.msra.mxu0 0.0
  %229 = vmatprep.subr.mxu0 0.0
  %230 = vmatpush1.msra.mxu0 0.0
  %231 = vmatprep.subr.mxu0 0.0
  %232 = vmatpush1.msra.mxu0 0.0
  %233 = vmatprep.subr.mxu0 0.0
  %234 = vmatpush1.msra.mxu0 0.0
  %235 = vmatprep.subr.mxu0 0.0
  %236 = vmatpush1.msra.mxu0 0.0
  %237 = vmatprep.subr.mxu0 0.0
  %238 = vmatpush1.msra.mxu0 0.0
  %239 = vmatprep.subr.mxu0 0.0
  %240 = vmatpush1.msra.mxu0 0.0
  %241 = vmatprep.subr.mxu0 0.0
  %242 = vmatpush1.msra.mxu0 0.0
  %243 = vmatprep.subr.mxu0 0.0
  %244 = vmatpush1.msra.mxu0 0.0
  %245 = vmatprep.subr.mxu0 0.0
  %246 = vmatpush1.msra.mxu0 0.0
  %247 = vmatprep.subr.mxu0 0.0
  %248 = vmatpush1.msra.mxu0 0.0
  %249 = vmatprep.subr.mxu0 0.0
  %250 = vmatpush1.msra.mxu0 0.0
  %251 = vmatprep.mubr.f32.mxu0 0.0
  %252 = vmatmul.mubr.f32.gmra.mrb[0].mxu0 %v185
  %v253 = vpop.f32.mrb[0].mxu0
  %v254 = vadd.f32 0.0, %v253
  %v255 = vpop.f32.mrb[0].mxu0
  %256 = vdwg.mxu0
  %v257 = vadd.f32 %v183, %v254
  %v258 = vtanh.pop %v257
  %v259 = vld [vmem:[%s0 + $0x3] sm:$0x1]
  %v261 = vsel %vm31, %v258, 0
  %263 = vmatprep.subr.mxu0 0.0
  %264 = vmatpush1.msra.mxu0 %v26
  %265 = vmatprep.subr.mxu0 0.0
  %266 = vmatpush1.msra.mxu0 %v27
  %267 = vmatprep.subr.mxu0 0.0
  %268 = vmatpush1.msra.mxu0 %v28
  %269 = vmatprep.subr.mxu0 0.0
  %270 = vmatpush1.msra.mxu0 %v29
  %271 = vmatprep.subr.mxu0 0.0
  %272 = vmatpush1.msra.mxu0 0.0
  %273 = vmatprep.subr.mxu0 0.0
  %274 = vmatpush1.msra.mxu0 0.0
  %275 = vmatprep.subr.mxu0 0.0
  %276 = vmatpush1.msra.mxu0 0.0
  %277 = vmatprep.subr.mxu0 0.0
  %278 = vmatpush1.msra.mxu0 0.0
  %279 = vmatprep.subr.mxu0 0.0
  %280 = vmatpush1.msra.mxu0 0.0
  %281 = vmatprep.subr.mxu0 0.0
  %282 = vmatpush1.msra.mxu0 0.0
  %283 = vmatprep.subr.mxu0 0.0
  %284 = vmatpush1.msra.mxu0 0.0
  %285 = vmatprep.subr.mxu0 0.0
  %286 = vmatpush1.msra.mxu0 0.0
  %287 = vmatprep.subr.mxu0 0.0
  %288 = vmatpush1.msra.mxu0 0.0
  %289 = vmatprep.subr.mxu0 0.0
  %290 = vmatpush1.msra.mxu0 0.0
  %291 = vmatprep.subr.mxu0 0.0
  %292 = vmatpush1.msra.mxu0 0.0
  %293 = vmatprep.subr.mxu0 0.0
  %294 = vmatpush1.msra.mxu0 0.0
  %295 = vmatprep.subr.mxu0 0.0
  %296 = vmatpush1.msra.mxu0 0.0
  %297 = vmatprep.subr.mxu0 0.0
  %298 = vmatpush1.msra.mxu0 0.0
  %299 = vmatprep.subr.mxu0 0.0
  %300 = vmatpush1.msra.mxu0 0.0
  %301 = vmatprep.subr.mxu0 0.0
  %302 = vmatpush1.msra.mxu0 0.0
  %303 = vmatprep.subr.mxu0 0.0
  %304 = vmatpush1.msra.mxu0 0.0
  %305 = vmatprep.subr.mxu0 0.0
  %306 = vmatpush1.msra.mxu0 0.0
  %307 = vmatprep.subr.mxu0 0.0
  %308 = vmatpush1.msra.mxu0 0.0
  %309 = vmatprep.subr.mxu0 0.0
  %310 = vmatpush1.msra.mxu0 0.0
  %311 = vmatprep.subr.mxu0 0.0
  %312 = vmatpush1.msra.mxu0 0.0
  %313 = vmatprep.subr.mxu0 0.0
  %314 = vmatpush1.msra.mxu0 0.0
  %315 = vmatprep.subr.mxu0 0.0
  %316 = vmatpush1.msra.mxu0 0.0
  %317 = vmatprep.subr.mxu0 0.0
  %318 = vmatpush1.msra.mxu0 0.0
  %319 = vmatprep.subr.mxu0 0.0
  %320 = vmatpush1.msra.mxu0 0.0
  %321 = vmatprep.subr.mxu0 0.0
  %322 = vmatpush1.msra.mxu0 0.0
  %323 = vmatprep.subr.mxu0 0.0
  %324 = vmatpush1.msra.mxu0 0.0
  %325 = vmatprep.subr.mxu0 0.0
  %326 = vmatpush1.msra.mxu0 0.0
  %327 = vmatprep.mubr.f32.mxu0 0.0
  %328 = vmatmul.mubr.f32.gmra.mrb[0].mxu0 %v261
  %v329 = vpop.f32.mrb[0].mxu0
  %v330 = vadd.f32 0.0, %v329
  %v331 = vpop.f32.mrb[0].mxu0
  %332 = vdwg.mxu0
  %v333 = vadd.f32 %v259, %v330
  %v334 = vtanh.pop %v333
  %v335 = vld [vmem:[%s0 + $0x4] sm:$0x1]
  %v337 = vsel %vm31, %v334, 0
  %339 = vmatprep.subr.mxu0 0.0
  %340 = vmatpush1.msra.mxu0 %v26
  %341 = vmatprep.subr.mxu0 0.0
  %342 = vmatpush1.msra.mxu0 %v27
  %343 = vmatprep.subr.mxu0 0.0
  %344 = vmatpush1.msra.mxu0 %v28
  %345 = vmatprep.subr.mxu0 0.0
  %346 = vmatpush1.msra.mxu0 %v29
  %347 = vmatprep.subr.mxu0 0.0
  %348 = vmatpush1.msra.mxu0 0.0
  %349 = vmatprep.subr.mxu0 0.0
  %350 = vmatpush1.msra.mxu0 0.0
  %351 = vmatprep.subr.mxu0 0.0
  %352 = vmatpush1.msra.mxu0 0.0
  %353 = vmatprep.subr.mxu0 0.0
  %354 = vmatpush1.msra.mxu0 0.0
  %355 = vmatprep.subr.mxu0 0.0
  %356 = vmatpush1.msra.mxu0 0.0
  %357 = vmatprep.subr.mxu0 0.0
  %358 = vmatpush1.msra.mxu0 0.0
  %359 = vmatprep.subr.mxu0 0.0
  %360 = vmatpush1.msra.mxu0 0.0
  %361 = vmatprep.subr.mxu0 0.0
  %362 = vmatpush1.msra.mxu0 0.0
  %363 = vmatprep.subr.mxu0 0.0
  %364 = vmatpush1.msra.mxu0 0.0
  %365 = vmatprep.subr.mxu0 0.0
  %366 = vmatpush1.msra.mxu0 0.0
  %367 = vmatprep.subr.mxu0 0.0
  %368 = vmatpush1.msra.mxu0 0.0
  %369 = vmatprep.subr.mxu0 0.0
  %370 = vmatpush1.msra.mxu0 0.0
  %371 = vmatprep.subr.mxu0 0.0
  %372 = vmatpush1.msra.mxu0 0.0
  %373 = vmatprep.subr.mxu0 0.0
  %374 = vmatpush1.msra.mxu0 0.0
  %375 = vmatprep.subr.mxu0 0.0
  %376 = vmatpush1.msra.mxu0 0.0
  %377 = vmatprep.subr.mxu0 0.0
  %378 = vmatpush1.msra.mxu0 0.0
  %379 = vmatprep.subr.mxu0 0.0
  %380 = vmatpush1.msra.mxu0 0.0
  %381 = vmatprep.subr.mxu0 0.0
  %382 = vmatpush1.msra.mxu0 0.0
  %383 = vmatprep.subr.mxu0 0.0
  %384 = vmatpush1.msra.mxu0 0.0
  %385 = vmatprep.subr.mxu0 0.0
  %386 = vmatpush1.msra.mxu0 0.0
  %387 = vmatprep.subr.mxu0 0.0
  %388 = vmatpush1.msra.mxu0 0.0
  %389 = vmatprep.subr.mxu0 0.0
  %390 = vmatpush1.msra.mxu0 0.0
  %391 = vmatprep.subr.mxu0 0.0
  %392 = vmatpush1.msra.mxu0 0.0
  %393 = vmatprep.subr.mxu0 0.0
  %394 = vmatpush1.msra.mxu0 0.0
  %395 = vmatprep.subr.mxu0 0.0
  %396 = vmatpush1.msra.mxu0 0.0
  %397 = vmatprep.subr.mxu0 0.0
  %398 = vmatpush1.msra.mxu0 0.0
  %399 = vmatprep.subr.mxu0 0.0
  %400 = vmatpush1.msra.mxu0 0.0
  %401 = vmatprep.subr.mxu0 0.0
  %402 = vmatpush1.msra.mxu0 0.0
  %403 = vmatprep.mubr.f32.mxu0 0.0
  %404 = vmatmul.mubr.f32.gmra.mrb[0].mxu0 %v337
  %v405 = vpop.f32.mrb[0].mxu0
  %v406 = vadd.f32 0.0, %v405
  %v407 = vpop.f32.mrb[0].mxu0
  %408 = vdwg.mxu0
  %v409 = vadd.f32 %v335, %v406
  %v410 = vtanh.pop %v409
  %v411 = vld [vmem:[%s0 + $0x5] sm:$0x1]
  %v413 = vsel %vm31, %v410, 0
  %415 = vmatprep.subr.mxu0 0.0
  %416 = vmatpush1.msra.mxu0 %v26
  %417 = vmatprep.subr.mxu0 0.0
  %418 = vmatpush1.msra.mxu0 %v27
  %419 = vmatprep.subr.mxu0 0.0
  %420 = vmatpush1.msra.mxu0 %v28
  %421 = vmatprep.subr.mxu0 0.0
  %422 = vmatpush1.msra.mxu0 %v29
  %423 = vmatprep.subr.mxu0 0.0
  %424 = vmatpush1.msra.mxu0 0.0
  %425 = vmatprep.subr.mxu0 0.0
  %426 = vmatpush1.msra.mxu0 0.0
  %427 = vmatprep.subr.mxu0 0.0
  %428 = vmatpush1.msra.mxu0 0.0
  %429 = vmatprep.subr.mxu0 0.0
  %430 = vmatpush1.msra.mxu0 0.0
  %431 = vmatprep.subr.mxu0 0.0
  %432 = vmatpush1.msra.mxu0 0.0
  %433 = vmatprep.subr.mxu0 0.0
  %434 = vmatpush1.msra.mxu0 0.0
  %435 = vmatprep.subr.mxu0 0.0
  %436 = vmatpush1.msra.mxu0 0.0
  %437 = vmatprep.subr.mxu0 0.0
  %438 = vmatpush1.msra.mxu0 0.0
  %439 = vmatprep.subr.mxu0 0.0
  %440 = vmatpush1.msra.mxu0 0.0
  %441 = vmatprep.subr.mxu0 0.0
  %442 = vmatpush1.msra.mxu0 0.0
  %443 = vmatprep.subr.mxu0 0.0
  %444 = vmatpush1.msra.mxu0 0.0
  %445 = vmatprep.subr.mxu0 0.0
  %446 = vmatpush1.msra.mxu0 0.0
  %447 = vmatprep.subr.mxu0 0.0
  %448 = vmatpush1.msra.mxu0 0.0
  %449 = vmatprep.subr.mxu0 0.0
  %450 = vmatpush1.msra.mxu0 0.0
  %451 = vmatprep.subr.mxu0 0.0
  %452 = vmatpush1.msra.mxu0 0.0
  %453 = vmatprep.subr.mxu0 0.0
  %454 = vmatpush1.msra.mxu0 0.0
  %455 = vmatprep.subr.mxu0 0.0
  %456 = vmatpush1.msra.mxu0 0.0
  %457 = vmatprep.subr.mxu0 0.0
  %458 = vmatpush1.msra.mxu0 0.0
  %459 = vmatprep.subr.mxu0 0.0
  %460 = vmatpush1.msra.mxu0 0.0
  %461 = vmatprep.subr.mxu0 0.0
  %462 = vmatpush1.msra.mxu0 0.0
  %463 = vmatprep.subr.mxu0 0.0
  %464 = vmatpush1.msra.mxu0 0.0
  %465 = vmatprep.subr.mxu0 0.0
  %466 = vmatpush1.msra.mxu0 0.0
  %467 = vmatprep.subr.mxu0 0.0
  %468 = vmatpush1.msra.mxu0 0.0
  %469 = vmatprep.subr.mxu0 0.0
  %470 = vmatpush1.msra.mxu0 0.0
  %471 = vmatprep.subr.mxu0 0.0
  %472 = vmatpush1.msra.mxu0 0.0
  %473 = vmatprep.subr.mxu0 0.0
  %474 = vmatpush1.msra.mxu0 0.0
  %475 = vmatprep.subr.mxu0 0.0
  %476 = vmatpush1.msra.mxu0 0.0
  %477 = vmatprep.subr.mxu0 0.0
  %478 = vmatpush1.msra.mxu0 0.0
  %479 = vmatprep.mubr.f32.mxu0 0.0
  %480 = vmatmul.mubr.f32.gmra.mrb[0].mxu0 %v413
  %v481 = vpop.f32.mrb[0].mxu0
  %v482 = vadd.f32 0.0, %v481
  %v483 = vpop.f32.mrb[0].mxu0
  %484 = vdwg.mxu0
  %v485 = vadd.f32 %v411, %v482
  %v486 = vtanh.pop %v485
  %v487 = vld [vmem:[%s0 + $0x6] sm:$0x1]
  %v489 = vsel %vm31, %v486, 0
  %491 = vmatprep.subr.mxu0 0.0
  %492 = vmatpush1.msra.mxu0 %v26
  %493 = vmatprep.subr.mxu0 0.0
  %494 = vmatpush1.msra.mxu0 %v27
  %495 = vmatprep.subr.mxu0 0.0
  %496 = vmatpush1.msra.mxu0 %v28
  %497 = vmatprep.subr.mxu0 0.0
  %498 = vmatpush1.msra.mxu0 %v29
  %499 = vmatprep.subr.mxu0 0.0
  %500 = vmatpush1.msra.mxu0 0.0
  %501 = vmatprep.subr.mxu0 0.0
  %502 = vmatpush1.msra.mxu0 0.0
  %503 = vmatprep.subr.mxu0 0.0
  %504 = vmatpush1.msra.mxu0 0.0
  %505 = vmatprep.subr.mxu0 0.0
  %506 = vmatpush1.msra.mxu0 0.0
  %507 = vmatprep.subr.mxu0 0.0
  %508 = vmatpush1.msra.mxu0 0.0
  %509 = vmatprep.subr.mxu0 0.0
  %510 = vmatpush1.msra.mxu0 0.0
  %511 = vmatprep.subr.mxu0 0.0
  %512 = vmatpush1.msra.mxu0 0.0
  %513 = vmatprep.subr.mxu0 0.0
  %514 = vmatpush1.msra.mxu0 0.0
  %515 = vmatprep.subr.mxu0 0.0
  %516 = vmatpush1.msra.mxu0 0.0
  %517 = vmatprep.subr.mxu0 0.0
  %518 = vmatpush1.msra.mxu0 0.0
  %519 = vmatprep.subr.mxu0 0.0
  %520 = vmatpush1.msra.mxu0 0.0
  %521 = vmatprep.subr.mxu0 0.0
  %522 = vmatpush1.msra.mxu0 0.0
  %523 = vmatprep.subr.mxu0 0.0
  %524 = vmatpush1.msra.mxu0 0.0
  %525 = vmatprep.subr.mxu0 0.0
  %526 = vmatpush1.msra.mxu0 0.0
  %527 = vmatprep.subr.mxu0 0.0
  %528 = vmatpush1.msra.mxu0 0.0
  %529 = vmatprep.subr.mxu0 0.0
  %530 = vmatpush1.msra.mxu0 0.0
  %531 = vmatprep.subr.mxu0 0.0
  %532 = vmatpush1.msra.mxu0 0.0
  %533 = vmatprep.subr.mxu0 0.0
  %534 = vmatpush1.msra.mxu0 0.0
  %535 = vmatprep.subr.mxu0 0.0
  %536 = vmatpush1.msra.mxu0 0.0
  %537 = vmatprep.subr.mxu0 0.0
  %538 = vmatpush1.msra.mxu0 0.0
  %539 = vmatprep.subr.mxu0 0.0
  %540 = vmatpush1.msra.mxu0 0.0
  %541 = vmatprep.subr.mxu0 0.0
  %542 = vmatpush1.msra.mxu0 0.0
  %543 = vmatprep.subr.mxu0 0.0
  %544 = vmatpush1.msra.mxu0 0.0
  %545 = vmatprep.subr.mxu0 0.0
  %546 = vmatpush1.msra.mxu0 0.0
  %547 = vmatprep.subr.mxu0 0.0
  %548 = vmatpush1.msra.mxu0 0.0
  %549 = vmatprep.subr.mxu0 0.0
  %550 = vmatpush1.msra.mxu0 0.0
  %551 = vmatprep.subr.mxu0 0.0
  %552 = vmatpush1.msra.mxu0 0.0
  %553 = vmatprep.subr.mxu0 0.0
  %554 = vmatpush1.msra.mxu0 0.0
  %555 = vmatprep.mubr.f32.mxu0 0.0
  %556 = vmatmul.mubr.f32.gmra.mrb[0].mxu0 %v489
  %v557 = vpop.f32.mrb[0].mxu0
  %v558 = vadd.f32 0.0, %v557
  %v559 = vpop.f32.mrb[0].mxu0
  %560 = vdwg.mxu0
  %v561 = vadd.f32 %v487, %v558
  %v562 = vtanh.pop %v561
  %v563 = vld [vmem:[%s0 + $0x7] sm:$0x1]
  %v565 = vsel %vm31, %v562, 0
  %567 = vmatprep.subr.mxu0 0.0
  %568 = vmatpush1.msra.mxu0 %v26
  %569 = vmatprep.subr.mxu0 0.0
  %570 = vmatpush1.msra.mxu0 %v27
  %571 = vmatprep.subr.mxu0 0.0
  %572 = vmatpush1.msra.mxu0 %v28
  %573 = vmatprep.subr.mxu0 0.0
  %574 = vmatpush1.msra.mxu0 %v29
  %575 = vmatprep.subr.mxu0 0.0
  %576 = vmatpush1.msra.mxu0 0.0
  %577 = vmatprep.subr.mxu0 0.0
  %578 = vmatpush1.msra.mxu0 0.0
  %579 = vmatprep.subr.mxu0 0.0
  %580 = vmatpush1.msra.mxu0 0.0
  %581 = vmatprep.subr.mxu0 0.0
  %582 = vmatpush1.msra.mxu0 0.0
  %583 = vmatprep.subr.mxu0 0.0
  %584 = vmatpush1.msra.mxu0 0.0
  %585 = vmatprep.subr.mxu0 0.0
  %586 = vmatpush1.msra.mxu0 0.0
  %587 = vmatprep.subr.mxu0 0.0
  %588 = vmatpush1.msra.mxu0 0.0
  %589 = vmatprep.subr.mxu0 0.0
  %590 = vmatpush1.msra.mxu0 0.0
  %591 = vmatprep.subr.mxu0 0.0
  %592 = vmatpush1.msra.mxu0 0.0
  %593 = vmatprep.subr.mxu0 0.0
  %594 = vmatpush1.msra.mxu0 0.0
  %595 = vmatprep.subr.mxu0 0.0
  %596 = vmatpush1.msra.mxu0 0.0
  %597 = vmatprep.subr.mxu0 0.0
  %598 = vmatpush1.msra.mxu0 0.0
  %599 = vmatprep.subr.mxu0 0.0
  %600 = vmatpush1.msra.mxu0 0.0
  %601 = vmatprep.subr.mxu0 0.0
  %602 = vmatpush1.msra.mxu0 0.0
  %603 = vmatprep.subr.mxu0 0.0
  %604 = vmatpush1.msra.mxu0 0.0
  %605 = vmatprep.subr.mxu0 0.0
  %606 = vmatpush1.msra.mxu0 0.0
  %607 = vmatprep.subr.mxu0 0.0
  %608 = vmatpush1.msra.mxu0 0.0
  %609 = vmatprep.subr.mxu0 0.0
  %610 = vmatpush1.msra.mxu0 0.0
  %611 = vmatprep.subr.mxu0 0.0
  %612 = vmatpush1.msra.mxu0 0.0
  %613 = vmatprep.subr.mxu0 0.0
  %614 = vmatpush1.msra.mxu0 0.0
  %615 = vmatprep.subr.mxu0 0.0
  %616 = vmatpush1.msra.mxu0 0.0
  %617 = vmatprep.subr.mxu0 0.0
  %618 = vmatpush1.msra.mxu0 0.0
  %619 = vmatprep.subr.mxu0 0.0
  %620 = vmatpush1.msra.mxu0 0.0
  %621 = vmatprep.subr.mxu0 0.0
  %622 = vmatpush1.msra.mxu0 0.0
  %623 = vmatprep.subr.mxu0 0.0
  %624 = vmatpush1.msra.mxu0 0.0
  %625 = vmatprep.subr.mxu0 0.0
  %626 = vmatpush1.msra.mxu0 0.0
  %627 = vmatprep.subr.mxu0 0.0
  %628 = vmatpush1.msra.mxu0 0.0
  %629 = vmatprep.subr.mxu0 0.0
  %630 = vmatpush1.msra.mxu0 0.0
  %631 = vmatprep.mubr.f32.mxu0 0.0
  %632 = vmatmul.mubr.f32.gmra.mrb[0].mxu0 %v565
  %v633 = vpop.f32.mrb[0].mxu0
  %v634 = vadd.f32 0.0, %v633
  %v635 = vpop.f32.mrb[0].mxu0
  %636 = vdwg.mxu0
  %v637 = vadd.f32 %v563, %v634
  %v638 = vtanh.pop %v637
  %v639 = vrot.slane %v182, 7
  %v641 = vrot.slane %v258, 6
  %v643 = vrot.slane %v334, 5
  %v645 = vrot.slane %v410, 4
  %v647 = vrot.slane %v486, 3
  %v649 = vrot.slane %v562, 2
  %v652 = vrot.slane %v638, 1
  %vm654 = vcmask 1040384
  %v655 = vsel %vm654, %v106, %v639
  %vm656 = vcmask 1041408
  %v657 = vsel %vm656, %v655, %v641
  %vm658 = vcmask 1042432
  %v659 = vsel %vm658, %v657, %v643
  %vm660 = vcmask 1043456
  %v661 = vsel %vm660, %v659, %v645
  %vm662 = vcmask 1044480
  %v663 = vsel %vm662, %v661, %v647
  %vm664 = vcmask 1045504
  %v665 = vsel %vm664, %v663, %v649
  %vm666 = vcmask 1046528
  %v667 = vsel %vm666, %v665, %v652
  %v668 = vld [vmem:[%s3] sm:$0xff]
  %v669 = vld [vmem:[%s3 + $0x8] sm:$0xff]
  %v670 = vld [vmem:[%s3 + $0x10] sm:$0xff]
  %v671 = vld [vmem:[%s3 + $0x18] sm:$0xff]
  %v672 = vld [vmem:[%s4] sm:$0xff]
  %v673 = vld [vmem:[%s4 + $0x8] sm:$0xff]
  %v674 = vld [vmem:[%s4 + $0x10] sm:$0xff]
  %v675 = vld [vmem:[%s4 + $0x18] sm:$0xff]
  %v676 = vsel %vm31, %v638, 0
  %678 = vmatprep.subr.mxu0 0.0
  %679 = vmatpush1.msra.mxu0 %v672
  %680 = vmatprep.subr.mxu0 0.0
  %681 = vmatpush1.msra.mxu0 %v673
  %682 = vmatprep.subr.mxu0 0.0
  %683 = vmatpush1.msra.mxu0 %v674
  %684 = vmatprep.subr.mxu0 0.0
  %685 = vmatpush1.msra.mxu0 %v675
  %686 = vmatprep.subr.mxu0 0.0
  %687 = vmatpush1.msra.mxu0 0.0
  %688 = vmatprep.subr.mxu0 0.0
  %689 = vmatpush1.msra.mxu0 0.0
  %690 = vmatprep.subr.mxu0 0.0
  %691 = vmatpush1.msra.mxu0 0.0
  %692 = vmatprep.subr.mxu0 0.0
  %693 = vmatpush1.msra.mxu0 0.0
  %694 = vmatprep.subr.mxu0 0.0
  %695 = vmatpush1.msra.mxu0 0.0
  %696 = vmatprep.subr.mxu0 0.0
  %697 = vmatpush1.msra.mxu0 0.0
  %698 = vmatprep.subr.mxu0 0.0
  %699 = vmatpush1.msra.mxu0 0.0
  %700 = vmatprep.subr.mxu0 0.0
  %701 = vmatpush1.msra.mxu0 0.0
  %702 = vmatprep.subr.mxu0 0.0
  %703 = vmatpush1.msra.mxu0 0.0
  %704 = vmatprep.subr.mxu0 0.0
  %705 = vmatpush1.msra.mxu0 0.0
  %706 = vmatprep.subr.mxu0 0.0
  %707 = vmatpush1.msra.mxu0 0.0
  %708 = vmatprep.subr.mxu0 0.0
  %709 = vmatpush1.msra.mxu0 0.0
  %710 = vmatprep.subr.mxu0 0.0
  %711 = vmatpush1.msra.mxu0 0.0
  %712 = vmatprep.subr.mxu0 0.0
  %713 = vmatpush1.msra.mxu0 0.0
  %714 = vmatprep.subr.mxu0 0.0
  %715 = vmatpush1.msra.mxu0 0.0
  %716 = vmatprep.subr.mxu0 0.0
  %717 = vmatpush1.msra.mxu0 0.0
  %718 = vmatprep.subr.mxu0 0.0
  %719 = vmatpush1.msra.mxu0 0.0
  %720 = vmatprep.subr.mxu0 0.0
  %721 = vmatpush1.msra.mxu0 0.0
  %722 = vmatprep.subr.mxu0 0.0
  %723 = vmatpush1.msra.mxu0 0.0
  %724 = vmatprep.subr.mxu0 0.0
  %725 = vmatpush1.msra.mxu0 0.0
  %726 = vmatprep.subr.mxu0 0.0
  %727 = vmatpush1.msra.mxu0 0.0
  %728 = vmatprep.subr.mxu0 0.0
  %729 = vmatpush1.msra.mxu0 0.0
  %730 = vmatprep.subr.mxu0 0.0
  %731 = vmatpush1.msra.mxu0 0.0
  %732 = vmatprep.subr.mxu0 0.0
  %733 = vmatpush1.msra.mxu0 0.0
  %734 = vmatprep.subr.mxu0 0.0
  %735 = vmatpush1.msra.mxu0 0.0
  %736 = vmatprep.subr.mxu0 0.0
  %737 = vmatpush1.msra.mxu0 0.0
  %738 = vmatprep.subr.mxu0 0.0
  %739 = vmatpush1.msra.mxu0 0.0
  %740 = vmatprep.subr.mxu0 0.0
  %741 = vmatpush1.msra.mxu0 0.0
  %742 = vmatprep.mubr.f32.mxu0 0.0
  %743 = vmatmul.mubr.f32.gmra.mrb[0].mxu0 %v676
  %v744 = vpop.f32.mrb[0].mxu0
  %v745 = vadd.f32 0.0, %v744
  %v746 = vpop.f32.mrb[0].mxu0
  %747 = vdwg.mxu0
  %v749 = vsel %vm31, %v667, 0
  %751 = vmatprep.subr.mxu0 0.0
  %752 = vmatpush1.xpose.msra.mxu0 %v749
  %753 = vmatprep.subr.mxu0 0.0
  %754 = vmatpush1.xpose.msra.mxu0 0.0
  %755 = vmatprep.subr.mxu0 0.0
  %756 = vmatpush1.xpose.msra.mxu0 0.0
  %757 = vmatprep.subr.mxu0 0.0
  %758 = vmatpush1.xpose.msra.mxu0 0.0
  %759 = vmatprep.subr.mxu0 0.0
  %760 = vmatpush1.xpose.msra.mxu0 0.0
  %761 = vmatprep.subr.mxu0 0.0
  %762 = vmatpush1.xpose.msra.mxu0 0.0
  %763 = vmatprep.subr.mxu0 0.0
  %764 = vmatpush1.xpose.msra.mxu0 0.0
  %765 = vmatprep.subr.mxu0 0.0
  %766 = vmatpush1.xpose.msra.mxu0 0.0
  %767 = vmatprep.subr.mxu0 0.0
  %768 = vmatpush1.xpose.msra.mxu0 0.0
  %769 = vmatprep.subr.mxu0 0.0
  %770 = vmatpush1.xpose.msra.mxu0 0.0
  %771 = vmatprep.subr.mxu0 0.0
  %772 = vmatpush1.xpose.msra.mxu0 0.0
  %773 = vmatprep.subr.mxu0 0.0
  %774 = vmatpush1.xpose.msra.mxu0 0.0
  %775 = vmatprep.subr.mxu0 0.0
  %776 = vmatpush1.xpose.msra.mxu0 0.0
  %777 = vmatprep.subr.mxu0 0.0
  %778 = vmatpush1.xpose.msra.mxu0 0.0
  %779 = vmatprep.subr.mxu0 0.0
  %780 = vmatpush1.xpose.msra.mxu0 0.0
  %781 = vmatprep.subr.mxu0 0.0
  %782 = vmatpush1.xpose.msra.mxu0 0.0
  %783 = vmatprep.subr.mxu0 0.0
  %784 = vmatpush1.xpose.msra.mxu0 0.0
  %785 = vmatprep.subr.mxu0 0.0
  %786 = vmatpush1.xpose.msra.mxu0 0.0
  %787 = vmatprep.subr.mxu0 0.0
  %788 = vmatpush1.xpose.msra.mxu0 0.0
  %789 = vmatprep.subr.mxu0 0.0
  %790 = vmatpush1.xpose.msra.mxu0 0.0
  %791 = vmatprep.subr.mxu0 0.0
  %792 = vmatpush1.xpose.msra.mxu0 0.0
  %793 = vmatprep.subr.mxu0 0.0
  %794 = vmatpush1.xpose.msra.mxu0 0.0
  %795 = vmatprep.subr.mxu0 0.0
  %796 = vmatpush1.xpose.msra.mxu0 0.0
  %797 = vmatprep.subr.mxu0 0.0
  %798 = vmatpush1.xpose.msra.mxu0 0.0
  %799 = vmatprep.subr.mxu0 0.0
  %800 = vmatpush1.xpose.msra.mxu0 0.0
  %801 = vmatprep.subr.mxu0 0.0
  %802 = vmatpush1.xpose.msra.mxu0 0.0
  %803 = vmatprep.subr.mxu0 0.0
  %804 = vmatpush1.xpose.msra.mxu0 0.0
  %805 = vmatprep.subr.mxu0 0.0
  %806 = vmatpush1.xpose.msra.mxu0 0.0
  %807 = vmatprep.subr.mxu0 0.0
  %808 = vmatpush1.xpose.msra.mxu0 0.0
  %809 = vmatprep.subr.mxu0 0.0
  %810 = vmatpush1.xpose.msra.mxu0 0.0
  %811 = vmatprep.subr.mxu0 0.0
  %812 = vmatpush1.xpose.msra.mxu0 0.0
  %813 = vmatprep.subr.mxu0 0.0
  %814 = vmatpush1.xpose.msra.mxu0 0.0
  %815 = vmatprep.mubr.f32.mxu0 0.0
  %816 = vmatmul.mubr.f32.gmra.mrb[0].mxu0 %v676
  %v817 = vpop.f32.mrb[0].mxu0
  %v818 = vadd.f32 0.0, %v817
  %v819 = vpop.f32.mrb[0].mxu0
  %820 = vdwg.mxu0
  %v821 = vmul.f32 %v818, 1.442695
  %v822 = vpow.pop %v821
  %vm823 = vcmask 57344
  %v824 = vsel %vm823, %v822, 0.0
  %825 = vadd.xlane.f32.xlu0 %v824
  %v826 = vpop.xlane.xlu0 %825
  %v827 = vrcp.pop %v826
  %v828 = vmul.f32 %v822, %v827
  %vm829 = vcmask 64512
  %v831 = vsel %vm829, %v828, 0
  %833 = vmatprep.subr.mxu0 0.0
  %834 = vmatpush1.msra.mxu0 %v667
  %835 = vmatprep.subr.mxu0 0.0
  %836 = vmatpush1.msra.mxu0 0.0
  %837 = vmatprep.subr.mxu0 0.0
  %838 = vmatpush1.msra.mxu0 0.0
  %839 = vmatprep.subr.mxu0 0.0
  %840 = vmatpush1.msra.mxu0 0.0
  %841 = vmatprep.subr.mxu0 0.0
  %842 = vmatpush1.msra.mxu0 0.0
  %843 = vmatprep.subr.mxu0 0.0
  %844 = vmatpush1.msra.mxu0 0.0
  %845 = vmatprep.subr.mxu0 0.0
  %846 = vmatpush1.msra.mxu0 0.0
  %847 = vmatprep.subr.mxu0 0.0
  %848 = vmatpush1.msra.mxu0 0.0
  %849 = vmatprep.subr.mxu0 0.0
  %850 = vmatpush1.msra.mxu0 0.0
  %851 = vmatprep.subr.mxu0 0.0
  %852 = vmatpush1.msra.mxu0 0.0
  %853 = vmatprep.subr.mxu0 0.0
  %854 = vmatpush1.msra.mxu0 0.0
  %855 = vmatprep.subr.mxu0 0.0
  %856 = vmatpush1.msra.mxu0 0.0
  %857 = vmatprep.subr.mxu0 0.0
  %858 = vmatpush1.msra.mxu0 0.0
  %859 = vmatprep.subr.mxu0 0.0
  %860 = vmatpush1.msra.mxu0 0.0
  %861 = vmatprep.subr.mxu0 0.0
  %862 = vmatpush1.msra.mxu0 0.0
  %863 = vmatprep.subr.mxu0 0.0
  %864 = vmatpush1.msra.mxu0 0.0
  %865 = vmatprep.subr.mxu0 0.0
  %866 = vmatpush1.msra.mxu0 0.0
  %867 = vmatprep.subr.mxu0 0.0
  %868 = vmatpush1.msra.mxu0 0.0
  %869 = vmatprep.subr.mxu0 0.0
  %870 = vmatpush1.msra.mxu0 0.0
  %871 = vmatprep.subr.mxu0 0.0
  %872 = vmatpush1.msra.mxu0 0.0
  %873 = vmatprep.subr.mxu0 0.0
  %874 = vmatpush1.msra.mxu0 0.0
  %875 = vmatprep.subr.mxu0 0.0
  %876 = vmatpush1.msra.mxu0 0.0
  %877 = vmatprep.subr.mxu0 0.0
  %878 = vmatpush1.msra.mxu0 0.0
  %879 = vmatprep.subr.mxu0 0.0
  %880 = vmatpush1.msra.mxu0 0.0
  %881 = vmatprep.subr.mxu0 0.0
  %882 = vmatpush1.msra.mxu0 0.0
  %883 = vmatprep.subr.mxu0 0.0
  %884 = vmatpush1.msra.mxu0 0.0
  %885 = vmatprep.subr.mxu0 0.0
  %886 = vmatpush1.msra.mxu0 0.0
  %887 = vmatprep.subr.mxu0 0.0
  %888 = vmatpush1.msra.mxu0 0.0
  %889 = vmatprep.subr.mxu0 0.0
  %890 = vmatpush1.msra.mxu0 0.0
  %891 = vmatprep.subr.mxu0 0.0
  %892 = vmatpush1.msra.mxu0 0.0
  %893 = vmatprep.subr.mxu0 0.0
  %894 = vmatpush1.msra.mxu0 0.0
  %895 = vmatprep.subr.mxu0 0.0
  %896 = vmatpush1.msra.mxu0 0.0
  %897 = vmatprep.mubr.f32.mxu0 0.0
  %898 = vmatmul.mubr.f32.gmra.mrb[0].mxu0 %v831
  %v899 = vpop.f32.mrb[0].mxu0
  %v900 = vadd.f32 0.0, %v899
  %v901 = vpop.f32.mrb[0].mxu0
  %902 = vdwg.mxu0
  %v903 = vld [vmem:[%s1] sm:$0x1]
  %v904 = vadd.f32 %v903, %v745
  %v906 = vsel %vm31, %v900, 0
  %908 = vmatprep.subr.mxu0 0.0
  %909 = vmatpush1.msra.mxu0 %v668
  %910 = vmatprep.subr.mxu0 0.0
  %911 = vmatpush1.msra.mxu0 %v669
  %912 = vmatprep.subr.mxu0 0.0
  %913 = vmatpush1.msra.mxu0 %v670
  %914 = vmatprep.subr.mxu0 0.0
  %915 = vmatpush1.msra.mxu0 %v671
  %916 = vmatprep.subr.mxu0 0.0
  %917 = vmatpush1.msra.mxu0 0.0
  %918 = vmatprep.subr.mxu0 0.0
  %919 = vmatpush1.msra.mxu0 0.0
  %920 = vmatprep.subr.mxu0 0.0
  %921 = vmatpush1.msra.mxu0 0.0
  %922 = vmatprep.subr.mxu0 0.0
  %923 = vmatpush1.msra.mxu0 0.0
  %924 = vmatprep.subr.mxu0 0.0
  %925 = vmatpush1.msra.mxu0 0.0
  %926 = vmatprep.subr.mxu0 0.0
  %927 = vmatpush1.msra.mxu0 0.0
  %928 = vmatprep.subr.mxu0 0.0
  %929 = vmatpush1.msra.mxu0 0.0
  %930 = vmatprep.subr.mxu0 0.0
  %931 = vmatpush1.msra.mxu0 0.0
  %932 = vmatprep.subr.mxu0 0.0
  %933 = vmatpush1.msra.mxu0 0.0
  %934 = vmatprep.subr.mxu0 0.0
  %935 = vmatpush1.msra.mxu0 0.0
  %936 = vmatprep.subr.mxu0 0.0
  %937 = vmatpush1.msra.mxu0 0.0
  %938 = vmatprep.subr.mxu0 0.0
  %939 = vmatpush1.msra.mxu0 0.0
  %940 = vmatprep.subr.mxu0 0.0
  %941 = vmatpush1.msra.mxu0 0.0
  %942 = vmatprep.subr.mxu0 0.0
  %943 = vmatpush1.msra.mxu0 0.0
  %944 = vmatprep.subr.mxu0 0.0
  %945 = vmatpush1.msra.mxu0 0.0
  %946 = vmatprep.subr.mxu0 0.0
  %947 = vmatpush1.msra.mxu0 0.0
  %948 = vmatprep.subr.mxu0 0.0
  %949 = vmatpush1.msra.mxu0 0.0
  %950 = vmatprep.subr.mxu0 0.0
  %951 = vmatpush1.msra.mxu0 0.0
  %952 = vmatprep.subr.mxu0 0.0
  %953 = vmatpush1.msra.mxu0 0.0
  %954 = vmatprep.subr.mxu0 0.0
  %955 = vmatpush1.msra.mxu0 0.0
  %956 = vmatprep.subr.mxu0 0.0
  %957 = vmatpush1.msra.mxu0 0.0
  %958 = vmatprep.subr.mxu0 0.0
  %959 = vmatpush1.msra.mxu0 0.0
  %960 = vmatprep.subr.mxu0 0.0
  %961 = vmatpush1.msra.mxu0 0.0
  %962 = vmatprep.subr.mxu0 0.0
  %963 = vmatpush1.msra.mxu0 0.0
  %964 = vmatprep.subr.mxu0 0.0
  %965 = vmatpush1.msra.mxu0 0.0
  %966 = vmatprep.subr.mxu0 0.0
  %967 = vmatpush1.msra.mxu0 0.0
  %968 = vmatprep.subr.mxu0 0.0
  %969 = vmatpush1.msra.mxu0 0.0
  %970 = vmatprep.subr.mxu0 0.0
  %971 = vmatpush1.msra.mxu0 0.0
  %972 = vmatprep.mubr.f32.mxu0 0.0
  %973 = vmatmul.mubr.f32.gmra.mrb[0].mxu0 %v906
  %v974 = vpop.f32.mrb[0].mxu0
  %v975 = vadd.f32 0.0, %v974
  %v976 = vpop.f32.mrb[0].mxu0
  %977 = vdwg.mxu0
  %v978 = vadd.f32 %v904, %v975
  %v979 = vtanh.pop %v978
  %v981 = vsel %vm31, %v979, 0
  %983 = vmatprep.subr.mxu0 0.0
  %984 = vmatpush1.msra.mxu0 %v672
  %985 = vmatprep.subr.mxu0 0.0
  %986 = vmatpush1.msra.mxu0 %v673
  %987 = vmatprep.subr.mxu0 0.0
  %988 = vmatpush1.msra.mxu0 %v674
  %989 = vmatprep.subr.mxu0 0.0
  %990 = vmatpush1.msra.mxu0 %v675
  %991 = vmatprep.subr.mxu0 0.0
  %992 = vmatpush1.msra.mxu0 0.0
  %993 = vmatprep.subr.mxu0 0.0
  %994 = vmatpush1.msra.mxu0 0.0
  %995 = vmatprep.subr.mxu0 0.0
  %996 = vmatpush1.msra.mxu0 0.0
  %997 = vmatprep.subr.mxu0 0.0
  %998 = vmatpush1.msra.mxu0 0.0
  %999 = vmatprep.subr.mxu0 0.0
  %1000 = vmatpush1.msra.mxu0 0.0
  %1001 = vmatprep.subr.mxu0 0.0
  %1002 = vmatpush1.msra.mxu0 0.0
  %1003 = vmatprep.subr.mxu0 0.0
  %1004 = vmatpush1.msra.mxu0 0.0
  %1005 = vmatprep.subr.mxu0 0.0
  %1006 = vmatpush1.msra.mxu0 0.0
  %1007 = vmatprep.subr.mxu0 0.0
  %1008 = vmatpush1.msra.mxu0 0.0
  %1009 = vmatprep.subr.mxu0 0.0
  %1010 = vmatpush1.msra.mxu0 0.0
  %1011 = vmatprep.subr.mxu0 0.0
  %1012 = vmatpush1.msra.mxu0 0.0
  %1013 = vmatprep.subr.mxu0 0.0
  %1014 = vmatpush1.msra.mxu0 0.0
  %1015 = vmatprep.subr.mxu0 0.0
  %1016 = vmatpush1.msra.mxu0 0.0
  %1017 = vmatprep.subr.mxu0 0.0
  %1018 = vmatpush1.msra.mxu0 0.0
  %1019 = vmatprep.subr.mxu0 0.0
  %1020 = vmatpush1.msra.mxu0 0.0
  %1021 = vmatprep.subr.mxu0 0.0
  %1022 = vmatpush1.msra.mxu0 0.0
  %1023 = vmatprep.subr.mxu0 0.0
  %1024 = vmatpush1.msra.mxu0 0.0
  %1025 = vmatprep.subr.mxu0 0.0
  %1026 = vmatpush1.msra.mxu0 0.0
  %1027 = vmatprep.subr.mxu0 0.0
  %1028 = vmatpush1.msra.mxu0 0.0
  %1029 = vmatprep.subr.mxu0 0.0
  %1030 = vmatpush1.msra.mxu0 0.0
  %1031 = vmatprep.subr.mxu0 0.0
  %1032 = vmatpush1.msra.mxu0 0.0
  %1033 = vmatprep.subr.mxu0 0.0
  %1034 = vmatpush1.msra.mxu0 0.0
  %1035 = vmatprep.subr.mxu0 0.0
  %1036 = vmatpush1.msra.mxu0 0.0
  %1037 = vmatprep.subr.mxu0 0.0
  %1038 = vmatpush1.msra.mxu0 0.0
  %1039 = vmatprep.subr.mxu0 0.0
  %1040 = vmatpush1.msra.mxu0 0.0
  %1041 = vmatprep.subr.mxu0 0.0
  %1042 = vmatpush1.msra.mxu0 0.0
  %1043 = vmatprep.subr.mxu0 0.0
  %1044 = vmatpush1.msra.mxu0 0.0
  %1045 = vmatprep.subr.mxu0 0.0
  %1046 = vmatpush1.msra.mxu0 0.0
  %1047 = vmatprep.mubr.f32.mxu0 0.0
  %1048 = vmatmul.mubr.f32.gmra.mrb[0].mxu0 %v981
  %v1049 = vpop.f32.mrb[0].mxu0
  %v1050 = vadd.f32 0.0, %v1049
  %v1051 = vpop.f32.mrb[0].mxu0
  %1052 = vdwg.mxu0
  %1053 = vmatprep.subr.mxu0 0.0
  %1054 = vmatpush1.xpose.msra.mxu0 %v749
  %1055 = vmatprep.subr.mxu0 0.0
  %1056 = vmatpush1.xpose.msra.mxu0 0.0
  %1057 = vmatprep.subr.mxu0 0.0
  %1058 = vmatpush1.xpose.msra.mxu0 0.0
  %1059 = vmatprep.subr.mxu0 0.0
  %1060 = vmatpush1.xpose.msra.mxu0 0.0
  %1061 = vmatprep.subr.mxu0 0.0
  %1062 = vmatpush1.xpose.msra.mxu0 0.0
  %1063 = vmatprep.subr.mxu0 0.0
  %1064 = vmatpush1.xpose.msra.mxu0 0.0
  %1065 = vmatprep.subr.mxu0 0.0
  %1066 = vmatpush1.xpose.msra.mxu0 0.0
  %1067 = vmatprep.subr.mxu0 0.0
  %1068 = vmatpush1.xpose.msra.mxu0 0.0
  %1069 = vmatprep.subr.mxu0 0.0
  %1070 = vmatpush1.xpose.msra.mxu0 0.0
  %1071 = vmatprep.subr.mxu0 0.0
  %1072 = vmatpush1.xpose.msra.mxu0 0.0
  %1073 = vmatprep.subr.mxu0 0.0
  %1074 = vmatpush1.xpose.msra.mxu0 0.0
  %1075 = vmatprep.subr.mxu0 0.0
  %1076 = vmatpush1.xpose.msra.mxu0 0.0
  %1077 = vmatprep.subr.mxu0 0.0
  %1078 = vmatpush1.xpose.msra.mxu0 0.0
  %1079 = vmatprep.subr.mxu0 0.0
  %1080 = vmatpush1.xpose.msra.mxu0 0.0
  %1081 = vmatprep.subr.mxu0 0.0
  %1082 = vmatpush1.xpose.msra.mxu0 0.0
  %1083 = vmatprep.subr.mxu0 0.0
  %1084 = vmatpush1.xpose.msra.mxu0 0.0
  %1085 = vmatprep.subr.mxu0 0.0
  %1086 = vmatpush1.xpose.msra.mxu0 0.0
  %1087 = vmatprep.subr.mxu0 0.0
  %1088 = vmatpush1.xpose.msra.mxu0 0.0
  %1089 = vmatprep.subr.mxu0 0.0
  %1090 = vmatpush1.xpose.msra.mxu0 0.0
  %1091 = vmatprep.subr.mxu0 0.0
  %1092 = vmatpush1.xpose.msra.mxu0 0.0
  %1093 = vmatprep.subr.mxu0 0.0
  %1094 = vmatpush1.xpose.msra.mxu0 0.0
  %1095 = vmatprep.subr.mxu0 0.0
  %1096 = vmatpush1.xpose.msra.mxu0 0.0
  %1097 = vmatprep.subr.mxu0 0.0
  %1098 = vmatpush1.xpose.msra.mxu0 0.0
  %1099 = vmatprep.subr.mxu0 0.0
  %1100 = vmatpush1.xpose.msra.mxu0 0.0
  %1101 = vmatprep.subr.mxu0 0.0
  %1102 = vmatpush1.xpose.msra.mxu0 0.0
  %1103 = vmatprep.subr.mxu0 0.0
  %1104 = vmatpush1.xpose.msra.mxu0 0.0
  %1105 = vmatprep.subr.mxu0 0.0
  %1106 = vmatpush1.xpose.msra.mxu0 0.0
  %1107 = vmatprep.subr.mxu0 0.0
  %1108 = vmatpush1.xpose.msra.mxu0 0.0
  %1109 = vmatprep.subr.mxu0 0.0
  %1110 = vmatpush1.xpose.msra.mxu0 0.0
  %1111 = vmatprep.subr.mxu0 0.0
  %1112 = vmatpush1.xpose.msra.mxu0 0.0
  %1113 = vmatprep.subr.mxu0 0.0
  %1114 = vmatpush1.xpose.msra.mxu0 0.0
  %1115 = vmatprep.subr.mxu0 0.0
  %1116 = vmatpush1.xpose.msra.mxu0 0.0
  %1117 = vmatprep.mubr.f32.mxu0 0.0
  %1118 = vmatmul.mubr.f32.gmra.mrb[0].mxu0 %v981
  %v1119 = vpop.f32.mrb[0].mxu0
  %v1120 = vadd.f32 0.0, %v1119
  %v1121 = vpop.f32.mrb[0].mxu0
  %1122 = vdwg.mxu0
  %v1123 = vmul.f32 %v1120, 1.442695
  %v1124 = vpow.pop %v1123
  %v1125 = vsel %vm823, %v1124, 0.0
  %1126 = vadd.xlane.f32.xlu0 %v1125
  %v1127 = vpop.xlane.xlu0 %1126
  %v1128 = vrcp.pop %v1127
  %v1129 = vmul.f32 %v1124, %v1128
  %v1131 = vsel %vm829, %v1129, 0
  %1133 = vmatprep.subr.mxu0 0.0
  %1134 = vmatpush1.msra.mxu0 %v667
  %1135 = vmatprep.subr.mxu0 0.0
  %1136 = vmatpush1.msra.mxu0 0.0
  %1137 = vmatprep.subr.mxu0 0.0
  %1138 = vmatpush1.msra.mxu0 0.0
  %1139 = vmatprep.subr.mxu0 0.0
  %1140 = vmatpush1.msra.mxu0 0.0
  %1141 = vmatprep.subr.mxu0 0.0
  %1142 = vmatpush1.msra.mxu0 0.0
  %1143 = vmatprep.subr.mxu0 0.0
  %1144 = vmatpush1.msra.mxu0 0.0
  %1145 = vmatprep.subr.mxu0 0.0
  %1146 = vmatpush1.msra.mxu0 0.0
  %1147 = vmatprep.subr.mxu0 0.0
  %1148 = vmatpush1.msra.mxu0 0.0
  %1149 = vmatprep.subr.mxu0 0.0
  %1150 = vmatpush1.msra.mxu0 0.0
  %1151 = vmatprep.subr.mxu0 0.0
  %1152 = vmatpush1.msra.mxu0 0.0
  %1153 = vmatprep.subr.mxu0 0.0
  %1154 = vmatpush1.msra.mxu0 0.0
  %1155 = vmatprep.subr.mxu0 0.0
  %1156 = vmatpush1.msra.mxu0 0.0
  %1157 = vmatprep.subr.mxu0 0.0
  %1158 = vmatpush1.msra.mxu0 0.0
  %1159 = vmatprep.subr.mxu0 0.0
  %1160 = vmatpush1.msra.mxu0 0.0
  %1161 = vmatprep.subr.mxu0 0.0
  %1162 = vmatpush1.msra.mxu0 0.0
  %1163 = vmatprep.subr.mxu0 0.0
  %1164 = vmatpush1.msra.mxu0 0.0
  %1165 = vmatprep.subr.mxu0 0.0
  %1166 = vmatpush1.msra.mxu0 0.0
  %1167 = vmatprep.subr.mxu0 0.0
  %1168 = vmatpush1.msra.mxu0 0.0
  %1169 = vmatprep.subr.mxu0 0.0
  %1170 = vmatpush1.msra.mxu0 0.0
  %1171 = vmatprep.subr.mxu0 0.0
  %1172 = vmatpush1.msra.mxu0 0.0
  %1173 = vmatprep.subr.mxu0 0.0
  %1174 = vmatpush1.msra.mxu0 0.0
  %1175 = vmatprep.subr.mxu0 0.0
  %1176 = vmatpush1.msra.mxu0 0.0
  %1177 = vmatprep.subr.mxu0 0.0
  %1178 = vmatpush1.msra.mxu0 0.0
  %1179 = vmatprep.subr.mxu0 0.0
  %1180 = vmatpush1.msra.mxu0 0.0
  %1181 = vmatprep.subr.mxu0 0.0
  %1182 = vmatpush1.msra.mxu0 0.0
  %1183 = vmatprep.subr.mxu0 0.0
  %1184 = vmatpush1.msra.mxu0 0.0
  %1185 = vmatprep.subr.mxu0 0.0
  %1186 = vmatpush1.msra.mxu0 0.0
  %1187 = vmatprep.subr.mxu0 0.0
  %1188 = vmatpush1.msra.mxu0 0.0
  %1189 = vmatprep.subr.mxu0 0.0
  %1190 = vmatpush1.msra.mxu0 0.0
  %1191 = vmatprep.subr.mxu0 0.0
  %1192 = vmatpush1.msra.mxu0 0.0
  %1193 = vmatprep.subr.mxu0 0.0
  %1194 = vmatpush1.msra.mxu0 0.0
  %1195 = vmatprep.subr.mxu0 0.0
  %1196 = vmatpush1.msra.mxu0 0.0
  %1197 = vmatprep.mubr.f32.mxu0 0.0
  %1198 = vmatmul.mubr.f32.gmra.mrb[0].mxu0 %v1131
  %v1199 = vpop.f32.mrb[0].mxu0
  %v1200 = vadd.f32 0.0, %v1199
  %v1201 = vpop.f32.mrb[0].mxu0
  %1202 = vdwg.mxu0
  %v1203 = vld [vmem:[%s1 + $0x1] sm:$0x1]
  %v1204 = vadd.f32 %v1203, %v1050
  %v1206 = vsel %vm31, %v1200, 0
  %1208 = vmatprep.subr.mxu0 0.0
  %1209 = vmatpush1.msra.mxu0 %v668
  %1210 = vmatprep.subr.mxu0 0.0
  %1211 = vmatpush1.msra.mxu0 %v669
  %1212 = vmatprep.subr.mxu0 0.0
  %1213 = vmatpush1.msra.mxu0 %v670
  %1214 = vmatprep.subr.mxu0 0.0
  %1215 = vmatpush1.msra.mxu0 %v671
  %1216 = vmatprep.subr.mxu0 0.0
  %1217 = vmatpush1.msra.mxu0 0.0
  %1218 = vmatprep.subr.mxu0 0.0
  %1219 = vmatpush1.msra.mxu0 0.0
  %1220 = vmatprep.subr.mxu0 0.0
  %1221 = vmatpush1.msra.mxu0 0.0
  %1222 = vmatprep.subr.mxu0 0.0
  %1223 = vmatpush1.msra.mxu0 0.0
  %1224 = vmatprep.subr.mxu0 0.0
  %1225 = vmatpush1.msra.mxu0 0.0
  %1226 = vmatprep.subr.mxu0 0.0
  %1227 = vmatpush1.msra.mxu0 0.0
  %1228 = vmatprep.subr.mxu0 0.0
  %1229 = vmatpush1.msra.mxu0 0.0
  %1230 = vmatprep.subr.mxu0 0.0
  %1231 = vmatpush1.msra.mxu0 0.0
  %1232 = vmatprep.subr.mxu0 0.0
  %1233 = vmatpush1.msra.mxu0 0.0
  %1234 = vmatprep.subr.mxu0 0.0
  %1235 = vmatpush1.msra.mxu0 0.0
  %1236 = vmatprep.subr.mxu0 0.0
  %1237 = vmatpush1.msra.mxu0 0.0
  %1238 = vmatprep.subr.mxu0 0.0
  %1239 = vmatpush1.msra.mxu0 0.0
  %1240 = vmatprep.subr.mxu0 0.0
  %1241 = vmatpush1.msra.mxu0 0.0
  %1242 = vmatprep.subr.mxu0 0.0
  %1243 = vmatpush1.msra.mxu0 0.0
  %1244 = vmatprep.subr.mxu0 0.0
  %1245 = vmatpush1.msra.mxu0 0.0
  %1246 = vmatprep.subr.mxu0 0.0
  %1247 = vmatpush1.msra.mxu0 0.0
  %1248 = vmatprep.subr.mxu0 0.0
  %1249 = vmatpush1.msra.mxu0 0.0
  %1250 = vmatprep.subr.mxu0 0.0
  %1251 = vmatpush1.msra.mxu0 0.0
  %1252 = vmatprep.subr.mxu0 0.0
  %1253 = vmatpush1.msra.mxu0 0.0
  %1254 = vmatprep.subr.mxu0 0.0
  %1255 = vmatpush1.msra.mxu0 0.0
  %1256 = vmatprep.subr.mxu0 0.0
  %1257 = vmatpush1.msra.mxu0 0.0
  %1258 = vmatprep.subr.mxu0 0.0
  %1259 = vmatpush1.msra.mxu0 0.0
  %1260 = vmatprep.subr.mxu0 0.0
  %1261 = vmatpush1.msra.mxu0 0.0
  %1262 = vmatprep.subr.mxu0 0.0
  %1263 = vmatpush1.msra.mxu0 0.0
  %1264 = vmatprep.subr.mxu0 0.0
  %1265 = vmatpush1.msra.mxu0 0.0
  %1266 = vmatprep.subr.mxu0 0.0
  %1267 = vmatpush1.msra.mxu0 0.0
  %1268 = vmatprep.subr.mxu0 0.0
  %1269 = vmatpush1.msra.mxu0 0.0
  %1270 = vmatprep.subr.mxu0 0.0
  %1271 = vmatpush1.msra.mxu0 0.0
  %1272 = vmatprep.mubr.f32.mxu0 0.0
  %1273 = vmatmul.mubr.f32.gmra.mrb[0].mxu0 %v1206
  %v1274 = vpop.f32.mrb[0].mxu0
  %v1275 = vadd.f32 0.0, %v1274
  %v1276 = vpop.f32.mrb[0].mxu0
  %1277 = vdwg.mxu0
  %v1278 = vadd.f32 %v1204, %v1275
  %v1279 = vtanh.pop %v1278
  %v1281 = vsel %vm31, %v1279, 0
  %1283 = vmatprep.subr.mxu0 0.0
  %1284 = vmatpush1.msra.mxu0 %v672
  %1285 = vmatprep.subr.mxu0 0.0
  %1286 = vmatpush1.msra.mxu0 %v673
  %1287 = vmatprep.subr.mxu0 0.0
  %1288 = vmatpush1.msra.mxu0 %v674
  %1289 = vmatprep.subr.mxu0 0.0
  %1290 = vmatpush1.msra.mxu0 %v675
  %1291 = vmatprep.subr.mxu0 0.0
  %1292 = vmatpush1.msra.mxu0 0.0
  %1293 = vmatprep.subr.mxu0 0.0
  %1294 = vmatpush1.msra.mxu0 0.0
  %1295 = vmatprep.subr.mxu0 0.0
  %1296 = vmatpush1.msra.mxu0 0.0
  %1297 = vmatprep.subr.mxu0 0.0
  %1298 = vmatpush1.msra.mxu0 0.0
  %1299 = vmatprep.subr.mxu0 0.0
  %1300 = vmatpush1.msra.mxu0 0.0
  %1301 = vmatprep.subr.mxu0 0.0
  %1302 = vmatpush1.msra.mxu0 0.0
  %1303 = vmatprep.subr.mxu0 0.0
  %1304 = vmatpush1.msra.mxu0 0.0
  %1305 = vmatprep.subr.mxu0 0.0
  %1306 = vmatpush1.msra.mxu0 0.0
  %1307 = vmatprep.subr.mxu0 0.0
  %1308 = vmatpush1.msra.mxu0 0.0
  %1309 = vmatprep.subr.mxu0 0.0
  %1310 = vmatpush1.msra.mxu0 0.0
  %1311 = vmatprep.subr.mxu0 0.0
  %1312 = vmatpush1.msra.mxu0 0.0
  %1313 = vmatprep.subr.mxu0 0.0
  %1314 = vmatpush1.msra.mxu0 0.0
  %1315 = vmatprep.subr.mxu0 0.0
  %1316 = vmatpush1.msra.mxu0 0.0
  %1317 = vmatprep.subr.mxu0 0.0
  %1318 = vmatpush1.msra.mxu0 0.0
  %1319 = vmatprep.subr.mxu0 0.0
  %1320 = vmatpush1.msra.mxu0 0.0
  %1321 = vmatprep.subr.mxu0 0.0
  %1322 = vmatpush1.msra.mxu0 0.0
  %1323 = vmatprep.subr.mxu0 0.0
  %1324 = vmatpush1.msra.mxu0 0.0
  %1325 = vmatprep.subr.mxu0 0.0
  %1326 = vmatpush1.msra.mxu0 0.0
  %1327 = vmatprep.subr.mxu0 0.0
  %1328 = vmatpush1.msra.mxu0 0.0
  %1329 = vmatprep.subr.mxu0 0.0
  %1330 = vmatpush1.msra.mxu0 0.0
  %1331 = vmatprep.subr.mxu0 0.0
  %1332 = vmatpush1.msra.mxu0 0.0
  %1333 = vmatprep.subr.mxu0 0.0
  %1334 = vmatpush1.msra.mxu0 0.0
  %1335 = vmatprep.subr.mxu0 0.0
  %1336 = vmatpush1.msra.mxu0 0.0
  %1337 = vmatprep.subr.mxu0 0.0
  %1338 = vmatpush1.msra.mxu0 0.0
  %1339 = vmatprep.subr.mxu0 0.0
  %1340 = vmatpush1.msra.mxu0 0.0
  %1341 = vmatprep.subr.mxu0 0.0
  %1342 = vmatpush1.msra.mxu0 0.0
  %1343 = vmatprep.subr.mxu0 0.0
  %1344 = vmatpush1.msra.mxu0 0.0
  %1345 = vmatprep.subr.mxu0 0.0
  %1346 = vmatpush1.msra.mxu0 0.0
  %1347 = vmatprep.mubr.f32.mxu0 0.0
  %1348 = vmatmul.mubr.f32.gmra.mrb[0].mxu0 %v1281
  %v1349 = vpop.f32.mrb[0].mxu0
  %v1350 = vadd.f32 0.0, %v1349
  %v1351 = vpop.f32.mrb[0].mxu0
  %1352 = vdwg.mxu0
  %1353 = vmatprep.subr.mxu0 0.0
  %1354 = vmatpush1.xpose.msra.mxu0 %v749
  %1355 = vmatprep.subr.mxu0 0.0
  %1356 = vmatpush1.xpose.msra.mxu0 0.0
  %1357 = vmatprep.subr.mxu0 0.0
  %1358 = vmatpush1.xpose.msra.mxu0 0.0
  %1359 = vmatprep.subr.mxu0 0.0
  %1360 = vmatpush1.xpose.msra.mxu0 0.0
  %1361 = vmatprep.subr.mxu0 0.0
  %1362 = vmatpush1.xpose.msra.mxu0 0.0
  %1363 = vmatprep.subr.mxu0 0.0
  %1364 = vmatpush1.xpose.msra.mxu0 0.0
  %1365 = vmatprep.subr.mxu0 0.0
  %1366 = vmatpush1.xpose.msra.mxu0 0.0
  %1367 = vmatprep.subr.mxu0 0.0
  %1368 = vmatpush1.xpose.msra.mxu0 0.0
  %1369 = vmatprep.subr.mxu0 0.0
  %1370 = vmatpush1.xpose.msra.mxu0 0.0
  %1371 = vmatprep.subr.mxu0 0.0
  %1372 = vmatpush1.xpose.msra.mxu0 0.0
  %1373 = vmatprep.subr.mxu0 0.0
  %1374 = vmatpush1.xpose.msra.mxu0 0.0
  %1375 = vmatprep.subr.mxu0 0.0
  %1376 = vmatpush1.xpose.msra.mxu0 0.0
  %1377 = vmatprep.subr.mxu0 0.0
  %1378 = vmatpush1.xpose.msra.mxu0 0.0
  %1379 = vmatprep.subr.mxu0 0.0
  %1380 = vmatpush1.xpose.msra.mxu0 0.0
  %1381 = vmatprep.subr.mxu0 0.0
  %1382 = vmatpush1.xpose.msra.mxu0 0.0
  %1383 = vmatprep.subr.mxu0 0.0
  %1384 = vmatpush1.xpose.msra.mxu0 0.0
  %1385 = vmatprep.subr.mxu0 0.0
  %1386 = vmatpush1.xpose.msra.mxu0 0.0
  %1387 = vmatprep.subr.mxu0 0.0
  %1388 = vmatpush1.xpose.msra.mxu0 0.0
  %1389 = vmatprep.subr.mxu0 0.0
  %1390 = vmatpush1.xpose.msra.mxu0 0.0
  %1391 = vmatprep.subr.mxu0 0.0
  %1392 = vmatpush1.xpose.msra.mxu0 0.0
  %1393 = vmatprep.subr.mxu0 0.0
  %1394 = vmatpush1.xpose.msra.mxu0 0.0
  %1395 = vmatprep.subr.mxu0 0.0
  %1396 = vmatpush1.xpose.msra.mxu0 0.0
  %1397 = vmatprep.subr.mxu0 0.0
  %1398 = vmatpush1.xpose.msra.mxu0 0.0
  %1399 = vmatprep.subr.mxu0 0.0
  %1400 = vmatpush1.xpose.msra.mxu0 0.0
  %1401 = vmatprep.subr.mxu0 0.0
  %1402 = vmatpush1.xpose.msra.mxu0 0.0
  %1403 = vmatprep.subr.mxu0 0.0
  %1404 = vmatpush1.xpose.msra.mxu0 0.0
  %1405 = vmatprep.subr.mxu0 0.0
  %1406 = vmatpush1.xpose.msra.mxu0 0.0
  %1407 = vmatprep.subr.mxu0 0.0
  %1408 = vmatpush1.xpose.msra.mxu0 0.0
  %1409 = vmatprep.subr.mxu0 0.0
  %1410 = vmatpush1.xpose.msra.mxu0 0.0
  %1411 = vmatprep.subr.mxu0 0.0
  %1412 = vmatpush1.xpose.msra.mxu0 0.0
  %1413 = vmatprep.subr.mxu0 0.0
  %1414 = vmatpush1.xpose.msra.mxu0 0.0
  %1415 = vmatprep.subr.mxu0 0.0
  %1416 = vmatpush1.xpose.msra.mxu0 0.0
  %1417 = vmatprep.mubr.f32.mxu0 0.0
  %1418 = vmatmul.mubr.f32.gmra.mrb[0].mxu0 %v1281
  %v1419 = vpop.f32.mrb[0].mxu0
  %v1420 = vadd.f32 0.0, %v1419
  %v1421 = vpop.f32.mrb[0].mxu0
  %1422 = vdwg.mxu0
  %v1423 = vmul.f32 %v1420, 1.442695
  %v1424 = vpow.pop %v1423
  %v1425 = vsel %vm823, %v1424, 0.0
  %1426 = vadd.xlane.f32.xlu0 %v1425
  %v1427 = vpop.xlane.xlu0 %1426
  %v1428 = vrcp.pop %v1427
  %v1429 = vmul.f32 %v1424, %v1428
  %v1431 = vsel %vm829, %v1429, 0
  %1433 = vmatprep.subr.mxu0 0.0
  %1434 = vmatpush1.msra.mxu0 %v667
  %1435 = vmatprep.subr.mxu0 0.0
  %1436 = vmatpush1.msra.mxu0 0.0
  %1437 = vmatprep.subr.mxu0 0.0
  %1438 = vmatpush1.msra.mxu0 0.0
  %1439 = vmatprep.subr.mxu0 0.0
  %1440 = vmatpush1.msra.mxu0 0.0
  %1441 = vmatprep.subr.mxu0 0.0
  %1442 = vmatpush1.msra.mxu0 0.0
  %1443 = vmatprep.subr.mxu0 0.0
  %1444 = vmatpush1.msra.mxu0 0.0
  %1445 = vmatprep.subr.mxu0 0.0
  %1446 = vmatpush1.msra.mxu0 0.0
  %1447 = vmatprep.subr.mxu0 0.0
  %1448 = vmatpush1.msra.mxu0 0.0
  %1449 = vmatprep.subr.mxu0 0.0
  %1450 = vmatpush1.msra.mxu0 0.0
  %1451 = vmatprep.subr.mxu0 0.0
  %1452 = vmatpush1.msra.mxu0 0.0
  %1453 = vmatprep.subr.mxu0 0.0
  %1454 = vmatpush1.msra.mxu0 0.0
  %1455 = vmatprep.subr.mxu0 0.0
  %1456 = vmatpush1.msra.mxu0 0.0
  %1457 = vmatprep.subr.mxu0 0.0
  %1458 = vmatpush1.msra.mxu0 0.0
  %1459 = vmatprep.subr.mxu0 0.0
  %1460 = vmatpush1.msra.mxu0 0.0
  %1461 = vmatprep.subr.mxu0 0.0
  %1462 = vmatpush1.msra.mxu0 0.0
  %1463 = vmatprep.subr.mxu0 0.0
  %1464 = vmatpush1.msra.mxu0 0.0
  %1465 = vmatprep.subr.mxu0 0.0
  %1466 = vmatpush1.msra.mxu0 0.0
  %1467 = vmatprep.subr.mxu0 0.0
  %1468 = vmatpush1.msra.mxu0 0.0
  %1469 = vmatprep.subr.mxu0 0.0
  %1470 = vmatpush1.msra.mxu0 0.0
  %1471 = vmatprep.subr.mxu0 0.0
  %1472 = vmatpush1.msra.mxu0 0.0
  %1473 = vmatprep.subr.mxu0 0.0
  %1474 = vmatpush1.msra.mxu0 0.0
  %1475 = vmatprep.subr.mxu0 0.0
  %1476 = vmatpush1.msra.mxu0 0.0
  %1477 = vmatprep.subr.mxu0 0.0
  %1478 = vmatpush1.msra.mxu0 0.0
  %1479 = vmatprep.subr.mxu0 0.0
  %1480 = vmatpush1.msra.mxu0 0.0
  %1481 = vmatprep.subr.mxu0 0.0
  %1482 = vmatpush1.msra.mxu0 0.0
  %1483 = vmatprep.subr.mxu0 0.0
  %1484 = vmatpush1.msra.mxu0 0.0
  %1485 = vmatprep.subr.mxu0 0.0
  %1486 = vmatpush1.msra.mxu0 0.0
  %1487 = vmatprep.subr.mxu0 0.0
  %1488 = vmatpush1.msra.mxu0 0.0
  %1489 = vmatprep.subr.mxu0 0.0
  %1490 = vmatpush1.msra.mxu0 0.0
  %1491 = vmatprep.subr.mxu0 0.0
  %1492 = vmatpush1.msra.mxu0 0.0
  %1493 = vmatprep.subr.mxu0 0.0
  %1494 = vmatpush1.msra.mxu0 0.0
  %1495 = vmatprep.subr.mxu0 0.0
  %1496 = vmatpush1.msra.mxu0 0.0
  %1497 = vmatprep.mubr.f32.mxu0 0.0
  %1498 = vmatmul.mubr.f32.gmra.mrb[0].mxu0 %v1431
  %v1499 = vpop.f32.mrb[0].mxu0
  %v1500 = vadd.f32 0.0, %v1499
  %v1501 = vpop.f32.mrb[0].mxu0
  %1502 = vdwg.mxu0
  %v1503 = vld [vmem:[%s1 + $0x2] sm:$0x1]
  %v1504 = vadd.f32 %v1503, %v1350
  %v1506 = vsel %vm31, %v1500, 0
  %1508 = vmatprep.subr.mxu0 0.0
  %1509 = vmatpush1.msra.mxu0 %v668
  %1510 = vmatprep.subr.mxu0 0.0
  %1511 = vmatpush1.msra.mxu0 %v669
  %1512 = vmatprep.subr.mxu0 0.0
  %1513 = vmatpush1.msra.mxu0 %v670
  %1514 = vmatprep.subr.mxu0 0.0
  %1515 = vmatpush1.msra.mxu0 %v671
  %1516 = vmatprep.subr.mxu0 0.0
  %1517 = vmatpush1.msra.mxu0 0.0
  %1518 = vmatprep.subr.mxu0 0.0
  %1519 = vmatpush1.msra.mxu0 0.0
  %1520 = vmatprep.subr.mxu0 0.0
  %1521 = vmatpush1.msra.mxu0 0.0
  %1522 = vmatprep.subr.mxu0 0.0
  %1523 = vmatpush1.msra.mxu0 0.0
  %1524 = vmatprep.subr.mxu0 0.0
  %1525 = vmatpush1.msra.mxu0 0.0
  %1526 = vmatprep.subr.mxu0 0.0
  %1527 = vmatpush1.msra.mxu0 0.0
  %1528 = vmatprep.subr.mxu0 0.0
  %1529 = vmatpush1.msra.mxu0 0.0
  %1530 = vmatprep.subr.mxu0 0.0
  %1531 = vmatpush1.msra.mxu0 0.0
  %1532 = vmatprep.subr.mxu0 0.0
  %1533 = vmatpush1.msra.mxu0 0.0
  %1534 = vmatprep.subr.mxu0 0.0
  %1535 = vmatpush1.msra.mxu0 0.0
  %1536 = vmatprep.subr.mxu0 0.0
  %1537 = vmatpush1.msra.mxu0 0.0
  %1538 = vmatprep.subr.mxu0 0.0
  %1539 = vmatpush1.msra.mxu0 0.0
  %1540 = vmatprep.subr.mxu0 0.0
  %1541 = vmatpush1.msra.mxu0 0.0
  %1542 = vmatprep.subr.mxu0 0.0
  %1543 = vmatpush1.msra.mxu0 0.0
  %1544 = vmatprep.subr.mxu0 0.0
  %1545 = vmatpush1.msra.mxu0 0.0
  %1546 = vmatprep.subr.mxu0 0.0
  %1547 = vmatpush1.msra.mxu0 0.0
  %1548 = vmatprep.subr.mxu0 0.0
  %1549 = vmatpush1.msra.mxu0 0.0
  %1550 = vmatprep.subr.mxu0 0.0
  %1551 = vmatpush1.msra.mxu0 0.0
  %1552 = vmatprep.subr.mxu0 0.0
  %1553 = vmatpush1.msra.mxu0 0.0
  %1554 = vmatprep.subr.mxu0 0.0
  %1555 = vmatpush1.msra.mxu0 0.0
  %1556 = vmatprep.subr.mxu0 0.0
  %1557 = vmatpush1.msra.mxu0 0.0
  %1558 = vmatprep.subr.mxu0 0.0
  %1559 = vmatpush1.msra.mxu0 0.0
  %1560 = vmatprep.subr.mxu0 0.0
  %1561 = vmatpush1.msra.mxu0 0.0
  %1562 = vmatprep.subr.mxu0 0.0
  %1563 = vmatpush1.msra.mxu0 0.0
  %1564 = vmatprep.subr.mxu0 0.0
  %1565 = vmatpush1.msra.mxu0 0.0
  %1566 = vmatprep.subr.mxu0 0.0
  %1567 = vmatpush1.msra.mxu0 0.0
  %1568 = vmatprep.subr.mxu0 0.0
  %1569 = vmatpush1.msra.mxu0 0.0
  %1570 = vmatprep.subr.mxu0 0.0
  %1571 = vmatpush1.msra.mxu0 0.0
  %1572 = vmatprep.mubr.f32.mxu0 0.0
  %1573 = vmatmul.mubr.f32.gmra.mrb[0].mxu0 %v1506
  %v1574 = vpop.f32.mrb[0].mxu0
  %v1575 = vadd.f32 0.0, %v1574
  %v1576 = vpop.f32.mrb[0].mxu0
  %1577 = vdwg.mxu0
  %v1578 = vadd.f32 %v1504, %v1575
  %v1579 = vtanh.pop %v1578
  %v1581 = vsel %vm31, %v1579, 0
  %1583 = vmatprep.subr.mxu0 0.0
  %1584 = vmatpush1.msra.mxu0 %v672
  %1585 = vmatprep.subr.mxu0 0.0
  %1586 = vmatpush1.msra.mxu0 %v673
  %1587 = vmatprep.subr.mxu0 0.0
  %1588 = vmatpush1.msra.mxu0 %v674
  %1589 = vmatprep.subr.mxu0 0.0
  %1590 = vmatpush1.msra.mxu0 %v675
  %1591 = vmatprep.subr.mxu0 0.0
  %1592 = vmatpush1.msra.mxu0 0.0
  %1593 = vmatprep.subr.mxu0 0.0
  %1594 = vmatpush1.msra.mxu0 0.0
  %1595 = vmatprep.subr.mxu0 0.0
  %1596 = vmatpush1.msra.mxu0 0.0
  %1597 = vmatprep.subr.mxu0 0.0
  %1598 = vmatpush1.msra.mxu0 0.0
  %1599 = vmatprep.subr.mxu0 0.0
  %1600 = vmatpush1.msra.mxu0 0.0
  %1601 = vmatprep.subr.mxu0 0.0
  %1602 = vmatpush1.msra.mxu0 0.0
  %1603 = vmatprep.subr.mxu0 0.0
  %1604 = vmatpush1.msra.mxu0 0.0
  %1605 = vmatprep.subr.mxu0 0.0
  %1606 = vmatpush1.msra.mxu0 0.0
  %1607 = vmatprep.subr.mxu0 0.0
  %1608 = vmatpush1.msra.mxu0 0.0
  %1609 = vmatprep.subr.mxu0 0.0
  %1610 = vmatpush1.msra.mxu0 0.0
  %1611 = vmatprep.subr.mxu0 0.0
  %1612 = vmatpush1.msra.mxu0 0.0
  %1613 = vmatprep.subr.mxu0 0.0
  %1614 = vmatpush1.msra.mxu0 0.0
  %1615 = vmatprep.subr.mxu0 0.0
  %1616 = vmatpush1.msra.mxu0 0.0
  %1617 = vmatprep.subr.mxu0 0.0
  %1618 = vmatpush1.msra.mxu0 0.0
  %1619 = vmatprep.subr.mxu0 0.0
  %1620 = vmatpush1.msra.mxu0 0.0
  %1621 = vmatprep.subr.mxu0 0.0
  %1622 = vmatpush1.msra.mxu0 0.0
  %1623 = vmatprep.subr.mxu0 0.0
  %1624 = vmatpush1.msra.mxu0 0.0
  %1625 = vmatprep.subr.mxu0 0.0
  %1626 = vmatpush1.msra.mxu0 0.0
  %1627 = vmatprep.subr.mxu0 0.0
  %1628 = vmatpush1.msra.mxu0 0.0
  %1629 = vmatprep.subr.mxu0 0.0
  %1630 = vmatpush1.msra.mxu0 0.0
  %1631 = vmatprep.subr.mxu0 0.0
  %1632 = vmatpush1.msra.mxu0 0.0
  %1633 = vmatprep.subr.mxu0 0.0
  %1634 = vmatpush1.msra.mxu0 0.0
  %1635 = vmatprep.subr.mxu0 0.0
  %1636 = vmatpush1.msra.mxu0 0.0
  %1637 = vmatprep.subr.mxu0 0.0
  %1638 = vmatpush1.msra.mxu0 0.0
  %1639 = vmatprep.subr.mxu0 0.0
  %1640 = vmatpush1.msra.mxu0 0.0
  %1641 = vmatprep.subr.mxu0 0.0
  %1642 = vmatpush1.msra.mxu0 0.0
  %1643 = vmatprep.subr.mxu0 0.0
  %1644 = vmatpush1.msra.mxu0 0.0
  %1645 = vmatprep.subr.mxu0 0.0
  %1646 = vmatpush1.msra.mxu0 0.0
  %1647 = vmatprep.mubr.f32.mxu0 0.0
  %1648 = vmatmul.mubr.f32.gmra.mrb[0].mxu0 %v1581
  %v1649 = vpop.f32.mrb[0].mxu0
  %v1650 = vadd.f32 0.0, %v1649
  %v1651 = vpop.f32.mrb[0].mxu0
  %1652 = vdwg.mxu0
  %1653 = vmatprep.subr.mxu0 0.0
  %1654 = vmatpush1.xpose.msra.mxu0 %v749
  %1655 = vmatprep.subr.mxu0 0.0
  %1656 = vmatpush1.xpose.msra.mxu0 0.0
  %1657 = vmatprep.subr.mxu0 0.0
  %1658 = vmatpush1.xpose.msra.mxu0 0.0
  %1659 = vmatprep.subr.mxu0 0.0
  %1660 = vmatpush1.xpose.msra.mxu0 0.0
  %1661 = vmatprep.subr.mxu0 0.0
  %1662 = vmatpush1.xpose.msra.mxu0 0.0
  %1663 = vmatprep.subr.mxu0 0.0
  %1664 = vmatpush1.xpose.msra.mxu0 0.0
  %1665 = vmatprep.subr.mxu0 0.0
  %1666 = vmatpush1.xpose.msra.mxu0 0.0
  %1667 = vmatprep.subr.mxu0 0.0
  %1668 = vmatpush1.xpose.msra.mxu0 0.0
  %1669 = vmatprep.subr.mxu0 0.0
  %1670 = vmatpush1.xpose.msra.mxu0 0.0
  %1671 = vmatprep.subr.mxu0 0.0
  %1672 = vmatpush1.xpose.msra.mxu0 0.0
  %1673 = vmatprep.subr.mxu0 0.0
  %1674 = vmatpush1.xpose.msra.mxu0 0.0
  %1675 = vmatprep.subr.mxu0 0.0
  %1676 = vmatpush1.xpose.msra.mxu0 0.0
  %1677 = vmatprep.subr.mxu0 0.0
  %1678 = vmatpush1.xpose.msra.mxu0 0.0
  %1679 = vmatprep.subr.mxu0 0.0
  %1680 = vmatpush1.xpose.msra.mxu0 0.0
  %1681 = vmatprep.subr.mxu0 0.0
  %1682 = vmatpush1.xpose.msra.mxu0 0.0
  %1683 = vmatprep.subr.mxu0 0.0
  %1684 = vmatpush1.xpose.msra.mxu0 0.0
  %1685 = vmatprep.subr.mxu0 0.0
  %1686 = vmatpush1.xpose.msra.mxu0 0.0
  %1687 = vmatprep.subr.mxu0 0.0
  %1688 = vmatpush1.xpose.msra.mxu0 0.0
  %1689 = vmatprep.subr.mxu0 0.0
  %1690 = vmatpush1.xpose.msra.mxu0 0.0
  %1691 = vmatprep.subr.mxu0 0.0
  %1692 = vmatpush1.xpose.msra.mxu0 0.0
  %1693 = vmatprep.subr.mxu0 0.0
  %1694 = vmatpush1.xpose.msra.mxu0 0.0
  %1695 = vmatprep.subr.mxu0 0.0
  %1696 = vmatpush1.xpose.msra.mxu0 0.0
  %1697 = vmatprep.subr.mxu0 0.0
  %1698 = vmatpush1.xpose.msra.mxu0 0.0
  %1699 = vmatprep.subr.mxu0 0.0
  %1700 = vmatpush1.xpose.msra.mxu0 0.0
  %1701 = vmatprep.subr.mxu0 0.0
  %1702 = vmatpush1.xpose.msra.mxu0 0.0
  %1703 = vmatprep.subr.mxu0 0.0
  %1704 = vmatpush1.xpose.msra.mxu0 0.0
  %1705 = vmatprep.subr.mxu0 0.0
  %1706 = vmatpush1.xpose.msra.mxu0 0.0
  %1707 = vmatprep.subr.mxu0 0.0
  %1708 = vmatpush1.xpose.msra.mxu0 0.0
  %1709 = vmatprep.subr.mxu0 0.0
  %1710 = vmatpush1.xpose.msra.mxu0 0.0
  %1711 = vmatprep.subr.mxu0 0.0
  %1712 = vmatpush1.xpose.msra.mxu0 0.0
  %1713 = vmatprep.subr.mxu0 0.0
  %1714 = vmatpush1.xpose.msra.mxu0 0.0
  %1715 = vmatprep.subr.mxu0 0.0
  %1716 = vmatpush1.xpose.msra.mxu0 0.0
  %1717 = vmatprep.mubr.f32.mxu0 0.0
  %1718 = vmatmul.mubr.f32.gmra.mrb[0].mxu0 %v1581
  %v1719 = vpop.f32.mrb[0].mxu0
  %v1720 = vadd.f32 0.0, %v1719
  %v1721 = vpop.f32.mrb[0].mxu0
  %1722 = vdwg.mxu0
  %v1723 = vmul.f32 %v1720, 1.442695
  %v1724 = vpow.pop %v1723
  %v1725 = vsel %vm823, %v1724, 0.0
  %1726 = vadd.xlane.f32.xlu0 %v1725
  %v1727 = vpop.xlane.xlu0 %1726
  %v1728 = vrcp.pop %v1727
  %v1729 = vmul.f32 %v1724, %v1728
  %v1731 = vsel %vm829, %v1729, 0
  %1733 = vmatprep.subr.mxu0 0.0
  %1734 = vmatpush1.msra.mxu0 %v667
  %1735 = vmatprep.subr.mxu0 0.0
  %1736 = vmatpush1.msra.mxu0 0.0
  %1737 = vmatprep.subr.mxu0 0.0
  %1738 = vmatpush1.msra.mxu0 0.0
  %1739 = vmatprep.subr.mxu0 0.0
  %1740 = vmatpush1.msra.mxu0 0.0
  %1741 = vmatprep.subr.mxu0 0.0
  %1742 = vmatpush1.msra.mxu0 0.0
  %1743 = vmatprep.subr.mxu0 0.0
  %1744 = vmatpush1.msra.mxu0 0.0
  %1745 = vmatprep.subr.mxu0 0.0
  %1746 = vmatpush1.msra.mxu0 0.0
  %1747 = vmatprep.subr.mxu0 0.0
  %1748 = vmatpush1.msra.mxu0 0.0
  %1749 = vmatprep.subr.mxu0 0.0
  %1750 = vmatpush1.msra.mxu0 0.0
  %1751 = vmatprep.subr.mxu0 0.0
  %1752 = vmatpush1.msra.mxu0 0.0
  %1753 = vmatprep.subr.mxu0 0.0
  %1754 = vmatpush1.msra.mxu0 0.0
  %1755 = vmatprep.subr.mxu0 0.0
  %1756 = vmatpush1.msra.mxu0 0.0
  %1757 = vmatprep.subr.mxu0 0.0
  %1758 = vmatpush1.msra.mxu0 0.0
  %1759 = vmatprep.subr.mxu0 0.0
  %1760 = vmatpush1.msra.mxu0 0.0
  %1761 = vmatprep.subr.mxu0 0.0
  %1762 = vmatpush1.msra.mxu0 0.0
  %1763 = vmatprep.subr.mxu0 0.0
  %1764 = vmatpush1.msra.mxu0 0.0
  %1765 = vmatprep.subr.mxu0 0.0
  %1766 = vmatpush1.msra.mxu0 0.0
  %1767 = vmatprep.subr.mxu0 0.0
  %1768 = vmatpush1.msra.mxu0 0.0
  %1769 = vmatprep.subr.mxu0 0.0
  %1770 = vmatpush1.msra.mxu0 0.0
  %1771 = vmatprep.subr.mxu0 0.0
  %1772 = vmatpush1.msra.mxu0 0.0
  %1773 = vmatprep.subr.mxu0 0.0
  %1774 = vmatpush1.msra.mxu0 0.0
  %1775 = vmatprep.subr.mxu0 0.0
  %1776 = vmatpush1.msra.mxu0 0.0
  %1777 = vmatprep.subr.mxu0 0.0
  %1778 = vmatpush1.msra.mxu0 0.0
  %1779 = vmatprep.subr.mxu0 0.0
  %1780 = vmatpush1.msra.mxu0 0.0
  %1781 = vmatprep.subr.mxu0 0.0
  %1782 = vmatpush1.msra.mxu0 0.0
  %1783 = vmatprep.subr.mxu0 0.0
  %1784 = vmatpush1.msra.mxu0 0.0
  %1785 = vmatprep.subr.mxu0 0.0
  %1786 = vmatpush1.msra.mxu0 0.0
  %1787 = vmatprep.subr.mxu0 0.0
  %1788 = vmatpush1.msra.mxu0 0.0
  %1789 = vmatprep.subr.mxu0 0.0
  %1790 = vmatpush1.msra.mxu0 0.0
  %1791 = vmatprep.subr.mxu0 0.0
  %1792 = vmatpush1.msra.mxu0 0.0
  %1793 = vmatprep.subr.mxu0 0.0
  %1794 = vmatpush1.msra.mxu0 0.0
  %1795 = vmatprep.subr.mxu0 0.0
  %1796 = vmatpush1.msra.mxu0 0.0
  %1797 = vmatprep.mubr.f32.mxu0 0.0
  %1798 = vmatmul.mubr.f32.gmra.mrb[0].mxu0 %v1731
  %v1799 = vpop.f32.mrb[0].mxu0
  %v1800 = vadd.f32 0.0, %v1799
  %v1801 = vpop.f32.mrb[0].mxu0
  %1802 = vdwg.mxu0
  %v1803 = vld [vmem:[%s1 + $0x3] sm:$0x1]
  %v1804 = vadd.f32 %v1803, %v1650
  %v1806 = vsel %vm31, %v1800, 0
  %1808 = vmatprep.subr.mxu0 0.0
  %1809 = vmatpush1.msra.mxu0 %v668
  %1810 = vmatprep.subr.mxu0 0.0
  %1811 = vmatpush1.msra.mxu0 %v669
  %1812 = vmatprep.subr.mxu0 0.0
  %1813 = vmatpush1.msra.mxu0 %v670
  %1814 = vmatprep.subr.mxu0 0.0
  %1815 = vmatpush1.msra.mxu0 %v671
  %1816 = vmatprep.subr.mxu0 0.0
  %1817 = vmatpush1.msra.mxu0 0.0
  %1818 = vmatprep.subr.mxu0 0.0
  %1819 = vmatpush1.msra.mxu0 0.0
  %1820 = vmatprep.subr.mxu0 0.0
  %1821 = vmatpush1.msra.mxu0 0.0
  %1822 = vmatprep.subr.mxu0 0.0
  %1823 = vmatpush1.msra.mxu0 0.0
  %1824 = vmatprep.subr.mxu0 0.0
  %1825 = vmatpush1.msra.mxu0 0.0
  %1826 = vmatprep.subr.mxu0 0.0
  %1827 = vmatpush1.msra.mxu0 0.0
  %1828 = vmatprep.subr.mxu0 0.0
  %1829 = vmatpush1.msra.mxu0 0.0
  %1830 = vmatprep.subr.mxu0 0.0
  %1831 = vmatpush1.msra.mxu0 0.0
  %1832 = vmatprep.subr.mxu0 0.0
  %1833 = vmatpush1.msra.mxu0 0.0
  %1834 = vmatprep.subr.mxu0 0.0
  %1835 = vmatpush1.msra.mxu0 0.0
  %1836 = vmatprep.subr.mxu0 0.0
  %1837 = vmatpush1.msra.mxu0 0.0
  %1838 = vmatprep.subr.mxu0 0.0
  %1839 = vmatpush1.msra.mxu0 0.0
  %1840 = vmatprep.subr.mxu0 0.0
  %1841 = vmatpush1.msra.mxu0 0.0
  %1842 = vmatprep.subr.mxu0 0.0
  %1843 = vmatpush1.msra.mxu0 0.0
  %1844 = vmatprep.subr.mxu0 0.0
  %1845 = vmatpush1.msra.mxu0 0.0
  %1846 = vmatprep.subr.mxu0 0.0
  %1847 = vmatpush1.msra.mxu0 0.0
  %1848 = vmatprep.subr.mxu0 0.0
  %1849 = vmatpush1.msra.mxu0 0.0
  %1850 = vmatprep.subr.mxu0 0.0
  %1851 = vmatpush1.msra.mxu0 0.0
  %1852 = vmatprep.subr.mxu0 0.0
  %1853 = vmatpush1.msra.mxu0 0.0
  %1854 = vmatprep.subr.mxu0 0.0
  %1855 = vmatpush1.msra.mxu0 0.0
  %1856 = vmatprep.subr.mxu0 0.0
  %1857 = vmatpush1.msra.mxu0 0.0
  %1858 = vmatprep.subr.mxu0 0.0
  %1859 = vmatpush1.msra.mxu0 0.0
  %1860 = vmatprep.subr.mxu0 0.0
  %1861 = vmatpush1.msra.mxu0 0.0
  %1862 = vmatprep.subr.mxu0 0.0
  %1863 = vmatpush1.msra.mxu0 0.0
  %1864 = vmatprep.subr.mxu0 0.0
  %1865 = vmatpush1.msra.mxu0 0.0
  %1866 = vmatprep.subr.mxu0 0.0
  %1867 = vmatpush1.msra.mxu0 0.0
  %1868 = vmatprep.subr.mxu0 0.0
  %1869 = vmatpush1.msra.mxu0 0.0
  %1870 = vmatprep.subr.mxu0 0.0
  %1871 = vmatpush1.msra.mxu0 0.0
  %1872 = vmatprep.mubr.f32.mxu0 0.0
  %1873 = vmatmul.mubr.f32.gmra.mrb[0].mxu0 %v1806
  %v1874 = vpop.f32.mrb[0].mxu0
  %v1875 = vadd.f32 0.0, %v1874
  %v1876 = vpop.f32.mrb[0].mxu0
  %1877 = vdwg.mxu0
  %v1878 = vadd.f32 %v1804, %v1875
  %v1879 = vtanh.pop %v1878
  %v1881 = vsel %vm31, %v1879, 0
  %1883 = vmatprep.subr.mxu0 0.0
  %1884 = vmatpush1.msra.mxu0 %v672
  %1885 = vmatprep.subr.mxu0 0.0
  %1886 = vmatpush1.msra.mxu0 %v673
  %1887 = vmatprep.subr.mxu0 0.0
  %1888 = vmatpush1.msra.mxu0 %v674
  %1889 = vmatprep.subr.mxu0 0.0
  %1890 = vmatpush1.msra.mxu0 %v675
  %1891 = vmatprep.subr.mxu0 0.0
  %1892 = vmatpush1.msra.mxu0 0.0
  %1893 = vmatprep.subr.mxu0 0.0
  %1894 = vmatpush1.msra.mxu0 0.0
  %1895 = vmatprep.subr.mxu0 0.0
  %1896 = vmatpush1.msra.mxu0 0.0
  %1897 = vmatprep.subr.mxu0 0.0
  %1898 = vmatpush1.msra.mxu0 0.0
  %1899 = vmatprep.subr.mxu0 0.0
  %1900 = vmatpush1.msra.mxu0 0.0
  %1901 = vmatprep.subr.mxu0 0.0
  %1902 = vmatpush1.msra.mxu0 0.0
  %1903 = vmatprep.subr.mxu0 0.0
  %1904 = vmatpush1.msra.mxu0 0.0
  %1905 = vmatprep.subr.mxu0 0.0
  %1906 = vmatpush1.msra.mxu0 0.0
  %1907 = vmatprep.subr.mxu0 0.0
  %1908 = vmatpush1.msra.mxu0 0.0
  %1909 = vmatprep.subr.mxu0 0.0
  %1910 = vmatpush1.msra.mxu0 0.0
  %1911 = vmatprep.subr.mxu0 0.0
  %1912 = vmatpush1.msra.mxu0 0.0
  %1913 = vmatprep.subr.mxu0 0.0
  %1914 = vmatpush1.msra.mxu0 0.0
  %1915 = vmatprep.subr.mxu0 0.0
  %1916 = vmatpush1.msra.mxu0 0.0
  %1917 = vmatprep.subr.mxu0 0.0
  %1918 = vmatpush1.msra.mxu0 0.0
  %1919 = vmatprep.subr.mxu0 0.0
  %1920 = vmatpush1.msra.mxu0 0.0
  %1921 = vmatprep.subr.mxu0 0.0
  %1922 = vmatpush1.msra.mxu0 0.0
  %1923 = vmatprep.subr.mxu0 0.0
  %1924 = vmatpush1.msra.mxu0 0.0
  %1925 = vmatprep.subr.mxu0 0.0
  %1926 = vmatpush1.msra.mxu0 0.0
  %1927 = vmatprep.subr.mxu0 0.0
  %1928 = vmatpush1.msra.mxu0 0.0
  %1929 = vmatprep.subr.mxu0 0.0
  %1930 = vmatpush1.msra.mxu0 0.0
  %1931 = vmatprep.subr.mxu0 0.0
  %1932 = vmatpush1.msra.mxu0 0.0
  %1933 = vmatprep.subr.mxu0 0.0
  %1934 = vmatpush1.msra.mxu0 0.0
  %1935 = vmatprep.subr.mxu0 0.0
  %1936 = vmatpush1.msra.mxu0 0.0
  %1937 = vmatprep.subr.mxu0 0.0
  %1938 = vmatpush1.msra.mxu0 0.0
  %1939 = vmatprep.subr.mxu0 0.0
  %1940 = vmatpush1.msra.mxu0 0.0
  %1941 = vmatprep.subr.mxu0 0.0
  %1942 = vmatpush1.msra.mxu0 0.0
  %1943 = vmatprep.subr.mxu0 0.0
  %1944 = vmatpush1.msra.mxu0 0.0
  %1945 = vmatprep.subr.mxu0 0.0
  %1946 = vmatpush1.msra.mxu0 0.0
  %1947 = vmatprep.mubr.f32.mxu0 0.0
  %1948 = vmatmul.mubr.f32.gmra.mrb[0].mxu0 %v1881
  %v1949 = vpop.f32.mrb[0].mxu0
  %v1950 = vadd.f32 0.0, %v1949
  %v1951 = vpop.f32.mrb[0].mxu0
  %1952 = vdwg.mxu0
  %1953 = vmatprep.subr.mxu0 0.0
  %1954 = vmatpush1.xpose.msra.mxu0 %v749
  %1955 = vmatprep.subr.mxu0 0.0
  %1956 = vmatpush1.xpose.msra.mxu0 0.0
  %1957 = vmatprep.subr.mxu0 0.0
  %1958 = vmatpush1.xpose.msra.mxu0 0.0
  %1959 = vmatprep.subr.mxu0 0.0
  %1960 = vmatpush1.xpose.msra.mxu0 0.0
  %1961 = vmatprep.subr.mxu0 0.0
  %1962 = vmatpush1.xpose.msra.mxu0 0.0
  %1963 = vmatprep.subr.mxu0 0.0
  %1964 = vmatpush1.xpose.msra.mxu0 0.0
  %1965 = vmatprep.subr.mxu0 0.0
  %1966 = vmatpush1.xpose.msra.mxu0 0.0
  %1967 = vmatprep.subr.mxu0 0.0
  %1968 = vmatpush1.xpose.msra.mxu0 0.0
  %1969 = vmatprep.subr.mxu0 0.0
  %1970 = vmatpush1.xpose.msra.mxu0 0.0
  %1971 = vmatprep.subr.mxu0 0.0
  %1972 = vmatpush1.xpose.msra.mxu0 0.0
  %1973 = vmatprep.subr.mxu0 0.0
  %1974 = vmatpush1.xpose.msra.mxu0 0.0
  %1975 = vmatprep.subr.mxu0 0.0
  %1976 = vmatpush1.xpose.msra.mxu0 0.0
  %1977 = vmatprep.subr.mxu0 0.0
  %1978 = vmatpush1.xpose.msra.mxu0 0.0
  %1979 = vmatprep.subr.mxu0 0.0
  %1980 = vmatpush1.xpose.msra.mxu0 0.0
  %1981 = vmatprep.subr.mxu0 0.0
  %1982 = vmatpush1.xpose.msra.mxu0 0.0
  %1983 = vmatprep.subr.mxu0 0.0
  %1984 = vmatpush1.xpose.msra.mxu0 0.0
  %1985 = vmatprep.subr.mxu0 0.0
  %1986 = vmatpush1.xpose.msra.mxu0 0.0
  %1987 = vmatprep.subr.mxu0 0.0
  %1988 = vmatpush1.xpose.msra.mxu0 0.0
  %1989 = vmatprep.subr.mxu0 0.0
  %1990 = vmatpush1.xpose.msra.mxu0 0.0
  %1991 = vmatprep.subr.mxu0 0.0
  %1992 = vmatpush1.xpose.msra.mxu0 0.0
  %1993 = vmatprep.subr.mxu0 0.0
  %1994 = vmatpush1.xpose.msra.mxu0 0.0
  %1995 = vmatprep.subr.mxu0 0.0
  %1996 = vmatpush1.xpose.msra.mxu0 0.0
  %1997 = vmatprep.subr.mxu0 0.0
  %1998 = vmatpush1.xpose.msra.mxu0 0.0
  %1999 = vmatprep.subr.mxu0 0.0
  %2000 = vmatpush1.xpose.msra.mxu0 0.0
  %2001 = vmatprep.subr.mxu0 0.0
  %2002 = vmatpush1.xpose.msra.mxu0 0.0
  %2003 = vmatprep.subr.mxu0 0.0
  %2004 = vmatpush1.xpose.msra.mxu0 0.0
  %2005 = vmatprep.subr.mxu0 0.0
  %2006 = vmatpush1.xpose.msra.mxu0 0.0
  %2007 = vmatprep.subr.mxu0 0.0
  %2008 = vmatpush1.xpose.msra.mxu0 0.0
  %2009 = vmatprep.subr.mxu0 0.0
  %2010 = vmatpush1.xpose.msra.mxu0 0.0
  %2011 = vmatprep.subr.mxu0 0.0
  %2012 = vmatpush1.xpose.msra.mxu0 0.0
  %2013 = vmatprep.subr.mxu0 0.0
  %2014 = vmatpush1.xpose.msra.mxu0 0.0
  %2015 = vmatprep.subr.mxu0 0.0
  %2016 = vmatpush1.xpose.msra.mxu0 0.0
  %2017 = vmatprep.mubr.f32.mxu0 0.0
  %2018 = vmatmul.mubr.f32.gmra.mrb[0].mxu0 %v1881
  %v2019 = vpop.f32.mrb[0].mxu0
  %v2020 = vadd.f32 0.0, %v2019
  %v2021 = vpop.f32.mrb[0].mxu0
  %2022 = vdwg.mxu0
  %v2023 = vmul.f32 %v2020, 1.442695
  %v2024 = vpow.pop %v2023
  %v2025 = vsel %vm823, %v2024, 0.0
  %2026 = vadd.xlane.f32.xlu0 %v2025
  %v2027 = vpop.xlane.xlu0 %2026
  %v2028 = vrcp.pop %v2027
  %v2029 = vmul.f32 %v2024, %v2028
  %v2031 = vsel %vm829, %v2029, 0
  %2033 = vmatprep.subr.mxu0 0.0
  %2034 = vmatpush1.msra.mxu0 %v667
  %2035 = vmatprep.subr.mxu0 0.0
  %2036 = vmatpush1.msra.mxu0 0.0
  %2037 = vmatprep.subr.mxu0 0.0
  %2038 = vmatpush1.msra.mxu0 0.0
  %2039 = vmatprep.subr.mxu0 0.0
  %2040 = vmatpush1.msra.mxu0 0.0
  %2041 = vmatprep.subr.mxu0 0.0
  %2042 = vmatpush1.msra.mxu0 0.0
  %2043 = vmatprep.subr.mxu0 0.0
  %2044 = vmatpush1.msra.mxu0 0.0
  %2045 = vmatprep.subr.mxu0 0.0
  %2046 = vmatpush1.msra.mxu0 0.0
  %2047 = vmatprep.subr.mxu0 0.0
  %2048 = vmatpush1.msra.mxu0 0.0
  %2049 = vmatprep.subr.mxu0 0.0
  %2050 = vmatpush1.msra.mxu0 0.0
  %2051 = vmatprep.subr.mxu0 0.0
  %2052 = vmatpush1.msra.mxu0 0.0
  %2053 = vmatprep.subr.mxu0 0.0
  %2054 = vmatpush1.msra.mxu0 0.0
  %2055 = vmatprep.subr.mxu0 0.0
  %2056 = vmatpush1.msra.mxu0 0.0
  %2057 = vmatprep.subr.mxu0 0.0
  %2058 = vmatpush1.msra.mxu0 0.0
  %2059 = vmatprep.subr.mxu0 0.0
  %2060 = vmatpush1.msra.mxu0 0.0
  %2061 = vmatprep.subr.mxu0 0.0
  %2062 = vmatpush1.msra.mxu0 0.0
  %2063 = vmatprep.subr.mxu0 0.0
  %2064 = vmatpush1.msra.mxu0 0.0
  %2065 = vmatprep.subr.mxu0 0.0
  %2066 = vmatpush1.msra.mxu0 0.0
  %2067 = vmatprep.subr.mxu0 0.0
  %2068 = vmatpush1.msra.mxu0 0.0
  %2069 = vmatprep.subr.mxu0 0.0
  %2070 = vmatpush1.msra.mxu0 0.0
  %2071 = vmatprep.subr.mxu0 0.0
  %2072 = vmatpush1.msra.mxu0 0.0
  %2073 = vmatprep.subr.mxu0 0.0
  %2074 = vmatpush1.msra.mxu0 0.0
  %2075 = vmatprep.subr.mxu0 0.0
  %2076 = vmatpush1.msra.mxu0 0.0
  %2077 = vmatprep.subr.mxu0 0.0
  %2078 = vmatpush1.msra.mxu0 0.0
  %2079 = vmatprep.subr.mxu0 0.0
  %2080 = vmatpush1.msra.mxu0 0.0
  %2081 = vmatprep.subr.mxu0 0.0
  %2082 = vmatpush1.msra.mxu0 0.0
  %2083 = vmatprep.subr.mxu0 0.0
  %2084 = vmatpush1.msra.mxu0 0.0
  %2085 = vmatprep.subr.mxu0 0.0
  %2086 = vmatpush1.msra.mxu0 0.0
  %2087 = vmatprep.subr.mxu0 0.0
  %2088 = vmatpush1.msra.mxu0 0.0
  %2089 = vmatprep.subr.mxu0 0.0
  %2090 = vmatpush1.msra.mxu0 0.0
  %2091 = vmatprep.subr.mxu0 0.0
  %2092 = vmatpush1.msra.mxu0 0.0
  %2093 = vmatprep.subr.mxu0 0.0
  %2094 = vmatpush1.msra.mxu0 0.0
  %2095 = vmatprep.subr.mxu0 0.0
  %2096 = vmatpush1.msra.mxu0 0.0
  %2097 = vmatprep.mubr.f32.mxu0 0.0
  %2098 = vmatmul.mubr.f32.gmra.mrb[0].mxu0 %v2031
  %v2099 = vpop.f32.mrb[0].mxu0
  %v2100 = vadd.f32 0.0, %v2099
  %v2101 = vpop.f32.mrb[0].mxu0
  %2102 = vdwg.mxu0
  %v2103 = vld [vmem:[%s1 + $0x4] sm:$0x1]
  %v2104 = vadd.f32 %v2103, %v1950
  %v2106 = vsel %vm31, %v2100, 0
  %2108 = vmatprep.subr.mxu0 0.0
  %2109 = vmatpush1.msra.mxu0 %v668
  %2110 = vmatprep.subr.mxu0 0.0
  %2111 = vmatpush1.msra.mxu0 %v669
  %2112 = vmatprep.subr.mxu0 0.0
  %2113 = vmatpush1.msra.mxu0 %v670
  %2114 = vmatprep.subr.mxu0 0.0
  %2115 = vmatpush1.msra.mxu0 %v671
  %2116 = vmatprep.subr.mxu0 0.0
  %2117 = vmatpush1.msra.mxu0 0.0
  %2118 = vmatprep.subr.mxu0 0.0
  %2119 = vmatpush1.msra.mxu0 0.0
  %2120 = vmatprep.subr.mxu0 0.0
  %2121 = vmatpush1.msra.mxu0 0.0
  %2122 = vmatprep.subr.mxu0 0.0
  %2123 = vmatpush1.msra.mxu0 0.0
  %2124 = vmatprep.subr.mxu0 0.0
  %2125 = vmatpush1.msra.mxu0 0.0
  %2126 = vmatprep.subr.mxu0 0.0
  %2127 = vmatpush1.msra.mxu0 0.0
  %2128 = vmatprep.subr.mxu0 0.0
  %2129 = vmatpush1.msra.mxu0 0.0
  %2130 = vmatprep.subr.mxu0 0.0
  %2131 = vmatpush1.msra.mxu0 0.0
  %2132 = vmatprep.subr.mxu0 0.0
  %2133 = vmatpush1.msra.mxu0 0.0
  %2134 = vmatprep.subr.mxu0 0.0
  %2135 = vmatpush1.msra.mxu0 0.0
  %2136 = vmatprep.subr.mxu0 0.0
  %2137 = vmatpush1.msra.mxu0 0.0
  %2138 = vmatprep.subr.mxu0 0.0
  %2139 = vmatpush1.msra.mxu0 0.0
  %2140 = vmatprep.subr.mxu0 0.0
  %2141 = vmatpush1.msra.mxu0 0.0
  %2142 = vmatprep.subr.mxu0 0.0
  %2143 = vmatpush1.msra.mxu0 0.0
  %2144 = vmatprep.subr.mxu0 0.0
  %2145 = vmatpush1.msra.mxu0 0.0
  %2146 = vmatprep.subr.mxu0 0.0
  %2147 = vmatpush1.msra.mxu0 0.0
  %2148 = vmatprep.subr.mxu0 0.0
  %2149 = vmatpush1.msra.mxu0 0.0
  %2150 = vmatprep.subr.mxu0 0.0
  %2151 = vmatpush1.msra.mxu0 0.0
  %2152 = vmatprep.subr.mxu0 0.0
  %2153 = vmatpush1.msra.mxu0 0.0
  %2154 = vmatprep.subr.mxu0 0.0
  %2155 = vmatpush1.msra.mxu0 0.0
  %2156 = vmatprep.subr.mxu0 0.0
  %2157 = vmatpush1.msra.mxu0 0.0
  %2158 = vmatprep.subr.mxu0 0.0
  %2159 = vmatpush1.msra.mxu0 0.0
  %2160 = vmatprep.subr.mxu0 0.0
  %2161 = vmatpush1.msra.mxu0 0.0
  %2162 = vmatprep.subr.mxu0 0.0
  %2163 = vmatpush1.msra.mxu0 0.0
  %2164 = vmatprep.subr.mxu0 0.0
  %2165 = vmatpush1.msra.mxu0 0.0
  %2166 = vmatprep.subr.mxu0 0.0
  %2167 = vmatpush1.msra.mxu0 0.0
  %2168 = vmatprep.subr.mxu0 0.0
  %2169 = vmatpush1.msra.mxu0 0.0
  %2170 = vmatprep.subr.mxu0 0.0
  %2171 = vmatpush1.msra.mxu0 0.0
  %2172 = vmatprep.mubr.f32.mxu0 0.0
  %2173 = vmatmul.mubr.f32.gmra.mrb[0].mxu0 %v2106
  %v2174 = vpop.f32.mrb[0].mxu0
  %v2175 = vadd.f32 0.0, %v2174
  %v2176 = vpop.f32.mrb[0].mxu0
  %2177 = vdwg.mxu0
  %v2178 = vadd.f32 %v2104, %v2175
  %v2179 = vtanh.pop %v2178
  %v2180 = vrot.slane %v1279, 7
  %v2182 = vrot.slane %v1579, 6
  %v2184 = vrot.slane %v1879, 5
  %v2187 = vrot.slane %v2179, 4
  %v2189 = vsel %vm654, %v979, %v2180
  %v2190 = vsel %vm656, %v2189, %v2182
  %v2191 = vsel %vm658, %v2190, %v2184
  %v2192 = vsel %vm660, %v2191, %v2187
  %v2193 = vld [vmem:[%s5] sm:$0xff]
  %v2194 = vld [vmem:[%s5 + $0x8] sm:$0xff]
  %v2195 = vld [vmem:[%s5 + $0x10] sm:$0xff]
  %v2196 = vld [vmem:[%s5 + $0x18] sm:$0xff]
  %v2197 = vld [vmem:[%s6] sm:$0x1]
  %v2199 = vlaneseq
  %v2200 = vshrl.u32 %v2199, 7
  %v2201 = vsub.s32 0, %v2200
  %v2202 = vrot.slane %v2197, %v2201
  %v2205 = vsel %vm31, %v2192, 0
  %2207 = vmatprep.subr.mxu0 0.0
  %2208 = vmatpush1.msra.mxu0 %v2193
  %2209 = vmatprep.subr.mxu0 0.0
  %2210 = vmatpush1.msra.mxu0 %v2194
  %2211 = vmatprep.subr.mxu0 0.0
  %2212 = vmatpush1.msra.mxu0 %v2195
  %2213 = vmatprep.subr.mxu0 0.0
  %2214 = vmatpush1.msra.mxu0 %v2196
  %2215 = vmatprep.subr.mxu0 0.0
  %2216 = vmatpush1.msra.mxu0 0.0
  %2217 = vmatprep.subr.mxu0 0.0
  %2218 = vmatpush1.msra.mxu0 0.0
  %2219 = vmatprep.subr.mxu0 0.0
  %2220 = vmatpush1.msra.mxu0 0.0
  %2221 = vmatprep.subr.mxu0 0.0
  %2222 = vmatpush1.msra.mxu0 0.0
  %2223 = vmatprep.subr.mxu0 0.0
  %2224 = vmatpush1.msra.mxu0 0.0
  %2225 = vmatprep.subr.mxu0 0.0
  %2226 = vmatpush1.msra.mxu0 0.0
  %2227 = vmatprep.subr.mxu0 0.0
  %2228 = vmatpush1.msra.mxu0 0.0
  %2229 = vmatprep.subr.mxu0 0.0
  %2230 = vmatpush1.msra.mxu0 0.0
  %2231 = vmatprep.subr.mxu0 0.0
  %2232 = vmatpush1.msra.mxu0 0.0
  %2233 = vmatprep.subr.mxu0 0.0
  %2234 = vmatpush1.msra.mxu0 0.0
  %2235 = vmatprep.subr.mxu0 0.0
  %2236 = vmatpush1.msra.mxu0 0.0
  %2237 = vmatprep.subr.mxu0 0.0
  %2238 = vmatpush1.msra.mxu0 0.0
  %2239 = vmatprep.subr.mxu0 0.0
  %2240 = vmatpush1.msra.mxu0 0.0
  %2241 = vmatprep.subr.mxu0 0.0
  %2242 = vmatpush1.msra.mxu0 0.0
  %2243 = vmatprep.subr.mxu0 0.0
  %2244 = vmatpush1.msra.mxu0 0.0
  %2245 = vmatprep.subr.mxu0 0.0
  %2246 = vmatpush1.msra.mxu0 0.0
  %2247 = vmatprep.subr.mxu0 0.0
  %2248 = vmatpush1.msra.mxu0 0.0
  %2249 = vmatprep.subr.mxu0 0.0
  %2250 = vmatpush1.msra.mxu0 0.0
  %2251 = vmatprep.subr.mxu0 0.0
  %2252 = vmatpush1.msra.mxu0 0.0
  %2253 = vmatprep.subr.mxu0 0.0
  %2254 = vmatpush1.msra.mxu0 0.0
  %2255 = vmatprep.subr.mxu0 0.0
  %2256 = vmatpush1.msra.mxu0 0.0
  %2257 = vmatprep.subr.mxu0 0.0
  %2258 = vmatpush1.msra.mxu0 0.0
  %2259 = vmatprep.subr.mxu0 0.0
  %2260 = vmatpush1.msra.mxu0 0.0
  %2261 = vmatprep.subr.mxu0 0.0
  %2262 = vmatpush1.msra.mxu0 0.0
  %2263 = vmatprep.subr.mxu0 0.0
  %2264 = vmatpush1.msra.mxu0 0.0
  %2265 = vmatprep.subr.mxu0 0.0
  %2266 = vmatpush1.msra.mxu0 0.0
  %2267 = vmatprep.subr.mxu0 0.0
  %2268 = vmatpush1.msra.mxu0 0.0
  %2269 = vmatprep.subr.mxu0 0.0
  %2270 = vmatpush1.msra.mxu0 0.0
  %2271 = vmatprep.mubr.f32.mxu0 0.0
  %2272 = vmatmul.mubr.f32.gmra.mrb[0].mxu0 %v2205
  %v2273 = vpop.f32.mrb[0].mxu0
  %v2274 = vadd.f32 %v2202, %v2273
  %v2275 = vpop.f32.mrb[0].mxu0
  %2276 = vdwg.mxu0
  %v2278 = vrot.slane %v2274, 7
  %v2280 = vsel %vm654, 0.0, %v2278
  %2281 = vst [vmem:[%s7] sm:$0x3f] %v2280
  // Predicated region
  $region30: #{seq2seq_forward.1} parent=0 // pred_check
    _
  $region31: #{seq2seq_forward.1} parent=0 // pred_check_branch
    %2283 = sbr.rel (0) target = $region33
  $region32: #{seq2seq_forward.1} parent=0 // pred_region
    _
  $region33: #{seq2seq_forward.1} parent=0 // pred_fallthru
    _
  // Predicated region
  $region34: #{seq2seq_forward.1} parent=0 // pred_check
    _
  $region35: #{seq2seq_forward.1} parent=0 // pred_check_branch
    %2285 = sbr.rel (0) target = $region37
  $region36: #{seq2seq_forward.1} parent=0 // pred_region
    _
  $region37: #{seq2seq_forward.1} parent=0 // pred_fallthru
    _

</llo_original>
